<compile_context>
chip_gen: v7x
topology: tpu7x:2x2x1
jax: 0.10.0
libtpu: 0.0.40
codegen_flags: <defaults>
</compile_context>

<pallas_src>
import math

import jax
import jax.numpy as jnp
from jax.experimental import pallas as pl
from jax.experimental.pallas import tpu as pltpu


def _round_up(x, m):
    return (x + m - 1) // m * m


def _cdiv(a, b):
    return (a + b - 1) // b


def _vmem_capacity_bytes():
    try:
        cap = int(pltpu.get_tpu_info().vmem_capacity_bytes)
        if cap > 0:
            return cap
    except Exception:
        pass
    return 64 * 1024 * 1024  # conservative v7x per-core figure


def _step_vmem_bytes(th, cin_pad, cout_pad, w, itemsize):
    """Approximate VMEM working set of one grid step.  Streamed blocks are
    double-buffered; the resident weights/bias also get two buffers."""
    w_pad = w + 2
    body = th * cin_pad * w_pad * itemsize
    halo = 2 * cin_pad * w_pad * itemsize
    outb = cout_pad * th * w * itemsize
    resident = (3 * cout_pad * 3 * cin_pad + cout_pad) * itemsize
    scratch = (th + 2) * cin_pad * w_pad * itemsize  # stitched row buffer
    return 2 * (body + halo + outb) + 2 * resident + scratch


def _pick_row_tile(batch, h, w, cin_pad, cout_pad, itemsize, budget_bytes):
    """Rows per grid step.  TH must be even (2-row halo block indexing) and,
    when there is more than one row block per image, TH*W must be a multiple
    of 128 so the flattened output block stays lane-aligned."""
    g = math.gcd(w, 128)
    base = 128 // g
    if base % 2:
        base *= 2
    if base >= h:
        # One row block per image (block == full lane extent, so the 128-lane
        # alignment rule does not apply).
        return _round_up(h, 2)
    th = max(base, min(32, (h // base) * base))
    while th > base and _step_vmem_bytes(th, cin_pad, cout_pad, w,
                                         itemsize) > budget_bytes:
        th -= base
    # Prefer >= 4 total grid steps: v7x shards the parallel grid across two
    # TensorCores and each core wants >= 2 steps for pipelined prefetch.
    while th > base and batch * _cdiv(h, th) < 4:
        th -= base
    return th


def conv_relu(x_nchw, weight, bias):
    """3x3 conv (padding=1) + ReLU with PyTorch NCHW semantics.

    x_nchw: (B, Cin, H, W); weight: (Cout, Cin, 3, 3); bias: (Cout,).
    Returns (B, Cout, H, W) in the input dtype.
    """
    B, Cin, H, W = x_nchw.shape
    Cout = weight.shape[0]
    dtype = x_nchw.dtype
    itemsize = jnp.dtype(dtype).itemsize
    sub = 8 if itemsize == 4 else 16          # sublane granularity

    Cin_pad = _round_up(Cin, sub)
    Cout_pad = _round_up(Cout, sub)
    W_pad = W + 2

    cap = _vmem_capacity_bytes()
    vmem_limit = max(32 * 1024 * 1024, min(int(cap * 0.7), 100 * 1024 * 1024))
    budget = vmem_limit // 2

    TH = _pick_row_tile(B, H, W, Cin_pad, Cout_pad, itemsize, budget)
    R = _cdiv(H, TH)                          # row blocks per image
    rows_total = R * TH + 2                   # padded rows incl. bottom halo

    # ---- single wrapper pass: NCHW -> (B, rows_total*Cin_pad, W+2) ----------
    x_p = jnp.pad(x_nchw, ((0, 0), (0, Cin_pad - Cin), (0, 0), (0, 0)))
    x_t = jnp.transpose(x_p, (0, 2, 1, 3))    # (B, H, Cin_pad, W)
    x_t = jnp.pad(x_t, ((0, 0), (1, rows_total - H - 1), (0, 0), (1, 1)))
    x2d = x_t.reshape(B, rows_total * Cin_pad, W_pad)

    # Weights: (Cout,Cin,3,3) -> (3*Cout_pad, 3*Cin_pad); row = kw*Cout_pad+co,
    # col = kh*Cin_pad+ci.  One matmul per output row then yields the three kw
    # taps stacked along the output-channel axis.
    w_p = jnp.pad(weight,
                  ((0, Cout_pad - Cout), (0, Cin_pad - Cin), (0, 0), (0, 0)))
    wc = jnp.transpose(w_p, (3, 0, 2, 1)).reshape(3 * Cout_pad, 3 * Cin_pad)
    wc = wc.astype(dtype)
    b2d = jnp.pad(bias, (0, Cout_pad - Cout)).reshape(Cout_pad, 1).astype(dtype)

    def kernel(w_ref, b_ref, body_ref, halo_ref, o_ref, rows_ref):
        # Stitch TH body rows + 2 halo rows into a ((TH+2)*Cin_pad, W+2) slab.
        # All row slices below are sublane-aligned (Cin_pad % 8 == 0).
        rows_ref[0:TH * Cin_pad, :] = body_ref[0]
        rows_ref[TH * Cin_pad:(TH + 2) * Cin_pad, :] = halo_ref[0]
        wmat = w_ref[...]
        bvec = b_ref[...]
        for r in range(TH):                                   # static unroll
            lhs = rows_ref[r * Cin_pad:(r + 3) * Cin_pad, :]  # (3*Cin_pad, W+2)
            u = jax.lax.dot_general(
                wmat, lhs, (((1,), (0,)), ((), ())),
                preferred_element_type=jnp.float32)           # (3*Cout_pad, W+2)
            acc = (u[0:Cout_pad, 0:W]
                   + u[Cout_pad:2 * Cout_pad, 1:W + 1]
                   + u[2 * Cout_pad:3 * Cout_pad, 2:W + 2]
                   + bvec)
            o_ref[0, :, r * W:(r + 1) * W] = jnp.maximum(
                acc, 0.0).astype(o_ref.dtype)

    out_full = pl.pallas_call(
        kernel,
        out_shape=jax.ShapeDtypeStruct((B, Cout_pad, R * TH * W), dtype),
        grid_spec=pltpu.PrefetchScalarGridSpec(
            num_scalar_prefetch=0,
            grid=(B, R),
            in_specs=[
                # resident weights / bias (constant index_map)
                pl.BlockSpec((3 * Cout_pad, 3 * Cin_pad), lambda b, r: (0, 0)),
                pl.BlockSpec((Cout_pad, 1), lambda b, r: (0, 0)),
                # streamed body rows [r*TH, r*TH+TH)
                pl.BlockSpec((1, TH * Cin_pad, W_pad), lambda b, r: (b, r, 0)),
                # streamed 2-row bottom halo [r*TH+TH, r*TH+TH+2)
                pl.BlockSpec((1, 2 * Cin_pad, W_pad),
                             lambda b, r: (b, (r + 1) * (TH // 2), 0)),
            ],
            out_specs=pl.BlockSpec((1, Cout_pad, TH * W),
                                   lambda b, r: (b, 0, r)),
            scratch_shapes=[pltpu.VMEM(((TH + 2) * Cin_pad, W_pad), dtype)],
        ),
        compiler_params=pltpu.CompilerParams(
            dimension_semantics=("parallel", "parallel"),
            vmem_limit_bytes=vmem_limit,
        ),
    )(wc, b2d, x2d, x2d)

    # (B, Cout_pad, R*TH*W) -> (B, Cout, H, W); free when Cout_pad == Cout and
    # R*TH == H (no post-kernel transpose pass in any case).
    out = out_full[:, :Cout, :H * W]
    return out.reshape(B, Cout, H, W)


def _reference(x_nchw, weight, bias):
    # Pure-JAX reference (same semantics as nn.Conv2d(3, padding=1) + ReLU).
    y = jax.lax.conv_general_dilated(
        x_nchw, weight, window_strides=(1, 1), padding=((1, 1), (1, 1)),
        dimension_numbers=("NCHW", "OIHW", "NCHW"))
    y = y + bias.reshape(1, -1, 1, 1)
    return jnp.maximum(y, 0.0)


if __name__ == "__main__":
    B, Cin, Cout, H, W = 2, 4, 8, 16, 16

    key = jax.random.PRNGKey(0)
    kx, kw, kb = jax.random.split(key, 3)
    fan_in = Cin * 3 * 3
    bound = 1.0 / (fan_in ** 0.5)

    # Quantize test data to the bf16 grid so the check is insensitive to the
    # MXU's f32 emulation mode (products are then exact; accumulation is f32).
    def _q(a):
        return a.astype(jnp.bfloat16).astype(jnp.float32)

    x = _q(jax.random.normal(kx, (B, Cin, H, W), dtype=jnp.float32))
    weight = _q(jax.random.uniform(kw, (Cout, Cin, 3, 3), jnp.float32,
                                   minval=-bound, maxval=bound))
    bias = _q(jax.random.uniform(kb, (Cout,), jnp.float32,
                                 minval=-bound, maxval=bound))

    out = jax.block_until_ready(conv_relu(x, weight, bias))
    ref = jax.block_until_ready(_reference(x, weight, bias))

    assert out.shape == (B, Cout, H, W)
    assert jnp.allclose(out, ref, atol=1e-4, rtol=1e-4), float(
        jnp.max(jnp.abs(out - ref)))

    print("KERNEL_OK")
</pallas_src>

<mosaic_0001>
module attributes {stable_mosaic.version = 11 : i64} {
  func.func @kernel(%arg0: i32, %arg1: i32, %arg2: memref<24x24xf32, #tpu.memory_space<vmem>>, %arg3: memref<8x1xf32, #tpu.memory_space<vmem>>, %arg4: memref<1x64x18xf32, #tpu.memory_space<vmem>>, %arg5: memref<1x16x18xf32, #tpu.memory_space<vmem>>, %arg6: memref<1x8x128xf32, #tpu.memory_space<vmem>>, %arg7: memref<80x18xf32, #tpu.memory_space<vmem>>) attributes {dimension_semantics = [#tpu.dimension_semantics<parallel>, #tpu.dimension_semantics<parallel>], iteration_bounds = array<i64: 2, 2>, scalar_prefetch = 0 : i64, scratch_operands = 1 : i64, tpu.core_type = #tpu.core_type<tc>, window_params = [{pipeline_mode = #tpu.pipeline_mode<synchronous>, transform_indices = @transform_0, window_bounds = array<i64: 24, 24>}, {pipeline_mode = #tpu.pipeline_mode<synchronous>, transform_indices = @transform_1, window_bounds = array<i64: 8, 1>}, {transform_indices = @transform_2, window_bounds = array<i64: 1, 64, 18>}, {transform_indices = @transform_3, window_bounds = array<i64: 1, 16, 18>}, {transform_indices = @transform_4, window_bounds = array<i64: 1, 8, 128>}]} {
    %c0 = arith.constant 0 : index
    %c0_0 = arith.constant 0 : index
    %c0_1 = arith.constant 0 : index
    %0 = vector.load %arg4[%c0, %c0_0, %c0_1] : memref<1x64x18xf32, #tpu.memory_space<vmem>>, vector<1x64x18xf32>
    %1 = vector.shape_cast %0 : vector<1x64x18xf32> to vector<64x18xf32>
    %c0_2 = arith.constant 0 : index
    %c0_3 = arith.constant 0 : index
    %2 = vector.load %arg7[%c0_2, %c0_3] : memref<80x18xf32, #tpu.memory_space<vmem>>, vector<64x18xf32>
    tpu.vector_store %arg7[%c0_2, %c0_3], %1 {strides = array<i32>} : memref<80x18xf32, #tpu.memory_space<vmem>>, vector<64x18xf32>,
    %c0_4 = arith.constant 0 : index
    %c0_5 = arith.constant 0 : index
    %c0_6 = arith.constant 0 : index
    %3 = vector.load %arg5[%c0_4, %c0_5, %c0_6] : memref<1x16x18xf32, #tpu.memory_space<vmem>>, vector<1x16x18xf32>
    %4 = vector.shape_cast %3 : vector<1x16x18xf32> to vector<16x18xf32>
    %c64 = arith.constant 64 : index
    %c0_7 = arith.constant 0 : index
    %5 = vector.load %arg7[%c64, %c0_7] : memref<80x18xf32, #tpu.memory_space<vmem>>, vector<16x18xf32>
    tpu.vector_store %arg7[%c64, %c0_7], %4 {strides = array<i32>} : memref<80x18xf32, #tpu.memory_space<vmem>>, vector<16x18xf32>,
    %c0_8 = arith.constant 0 : index
    %c0_9 = arith.constant 0 : index
    %6 = vector.load %arg2[%c0_8, %c0_9] : memref<24x24xf32, #tpu.memory_space<vmem>>, vector<24x24xf32>
    %c0_10 = arith.constant 0 : index
    %c0_11 = arith.constant 0 : index
    %7 = vector.load %arg3[%c0_10, %c0_11] : memref<8x1xf32, #tpu.memory_space<vmem>>, vector<8x1xf32>
    %c0_12 = arith.constant 0 : index
    %c0_13 = arith.constant 0 : index
    %8 = vector.load %arg7[%c0_12, %c0_13] : memref<80x18xf32, #tpu.memory_space<vmem>>, vector<24x18xf32>
    %cst = arith.constant dense<0.000000e+00> : vector<24x18xf32>
    %9 = tpu.matmul %6, %8, %cst {dimension_numbers = #tpu.dot_dimension_numbers<[1], [0], [0], [1], [0, 0, 1, 1], [], []>} : vector<24x24xf32>, vector<24x18xf32>, vector<24x18xf32> -> vector<24x18xf32>
    %10 = vector.extract_strided_slice %9 {offsets = [0, 0], sizes = [8, 16], strides = [1, 1]} : vector<24x18xf32> to vector<8x16xf32>
    %11 = vector.extract_strided_slice %9 {offsets = [8, 1], sizes = [8, 16], strides = [1, 1]} : vector<24x18xf32> to vector<8x16xf32>
    %12 = arith.addf %10, %11 : vector<8x16xf32>
    %13 = vector.extract_strided_slice %9 {offsets = [16, 2], sizes = [8, 16], strides = [1, 1]} : vector<24x18xf32> to vector<8x16xf32>
    %14 = arith.addf %12, %13 : vector<8x16xf32>
    %15 = vector.broadcast %7 : vector<8x1xf32> to vector<8x16xf32>
    %16 = arith.addf %14, %15 : vector<8x16xf32>
    %cst_14 = arith.constant 0.000000e+00 : f32
    %17 = vector.broadcast %cst_14 : f32 to vector<8x16xf32>
    %18 = arith.maximumf %16, %17 : vector<8x16xf32>
    %c0_15 = arith.constant 0 : index
    %c0_16 = arith.constant 0 : index
    %c0_17 = arith.constant 0 : index
    %19 = vector.load %arg6[%c0_15, %c0_16, %c0_17] : memref<1x8x128xf32, #tpu.memory_space<vmem>>, vector<1x8x16xf32>
    %20 = vector.shape_cast %19 : vector<1x8x16xf32> to vector<8x16xf32>
    %21 = vector.shape_cast %18 : vector<8x16xf32> to vector<1x8x16xf32>
    tpu.vector_store %arg6[%c0_15, %c0_16, %c0_17], %21 {strides = array<i32>} : memref<1x8x128xf32, #tpu.memory_space<vmem>>, vector<1x8x16xf32>,
    %c8 = arith.constant 8 : index
    %c0_18 = arith.constant 0 : index
    %22 = vector.load %arg7[%c8, %c0_18] : memref<80x18xf32, #tpu.memory_space<vmem>>, vector<24x18xf32>
    %cst_19 = arith.constant dense<0.000000e+00> : vector<24x18xf32>
    %23 = tpu.matmul %6, %22, %cst_19 {dimension_numbers = #tpu.dot_dimension_numbers<[1], [0], [0], [1], [0, 0, 1, 1], [], []>} : vector<24x24xf32>, vector<24x18xf32>, vector<24x18xf32> -> vector<24x18xf32>
    %24 = vector.extract_strided_slice %23 {offsets = [0, 0], sizes = [8, 16], strides = [1, 1]} : vector<24x18xf32> to vector<8x16xf32>
    %25 = vector.extract_strided_slice %23 {offsets = [8, 1], sizes = [8, 16], strides = [1, 1]} : vector<24x18xf32> to vector<8x16xf32>
    %26 = arith.addf %24, %25 : vector<8x16xf32>
    %27 = vector.extract_strided_slice %23 {offsets = [16, 2], sizes = [8, 16], strides = [1, 1]} : vector<24x18xf32> to vector<8x16xf32>
    %28 = arith.addf %26, %27 : vector<8x16xf32>
    %29 = vector.broadcast %7 : vector<8x1xf32> to vector<8x16xf32>
    %30 = arith.addf %28, %29 : vector<8x16xf32>
    %cst_20 = arith.constant 0.000000e+00 : f32
    %31 = vector.broadcast %cst_20 : f32 to vector<8x16xf32>
    %32 = arith.maximumf %30, %31 : vector<8x16xf32>
    %c0_21 = arith.constant 0 : index
    %c0_22 = arith.constant 0 : index
    %c16 = arith.constant 16 : index
    %33 = vector.load %arg6[%c0_21, %c0_22, %c16] : memref<1x8x128xf32, #tpu.memory_space<vmem>>, vector<1x8x16xf32>
    %34 = vector.shape_cast %33 : vector<1x8x16xf32> to vector<8x16xf32>
    %35 = vector.shape_cast %32 : vector<8x16xf32> to vector<1x8x16xf32>
    tpu.vector_store %arg6[%c0_21, %c0_22, %c16], %35 {strides = array<i32>} : memref<1x8x128xf32, #tpu.memory_space<vmem>>, vector<1x8x16xf32>,
    %c16_23 = arith.constant 16 : index
    %c0_24 = arith.constant 0 : index
    %36 = vector.load %arg7[%c16_23, %c0_24] : memref<80x18xf32, #tpu.memory_space<vmem>>, vector<24x18xf32>
    %cst_25 = arith.constant dense<0.000000e+00> : vector<24x18xf32>
    %37 = tpu.matmul %6, %36, %cst_25 {dimension_numbers = #tpu.dot_dimension_numbers<[1], [0], [0], [1], [0, 0, 1, 1], [], []>} : vector<24x24xf32>, vector<24x18xf32>, vector<24x18xf32> -> vector<24x18xf32>
    %38 = vector.extract_strided_slice %37 {offsets = [0, 0], sizes = [8, 16], strides = [1, 1]} : vector<24x18xf32> to vector<8x16xf32>
    %39 = vector.extract_strided_slice %37 {offsets = [8, 1], sizes = [8, 16], strides = [1, 1]} : vector<24x18xf32> to vector<8x16xf32>
    %40 = arith.addf %38, %39 : vector<8x16xf32>
    %41 = vector.extract_strided_slice %37 {offsets = [16, 2], sizes = [8, 16], strides = [1, 1]} : vector<24x18xf32> to vector<8x16xf32>
    %42 = arith.addf %40, %41 : vector<8x16xf32>
    %43 = vector.broadcast %7 : vector<8x1xf32> to vector<8x16xf32>
    %44 = arith.addf %42, %43 : vector<8x16xf32>
    %cst_26 = arith.constant 0.000000e+00 : f32
    %45 = vector.broadcast %cst_26 : f32 to vector<8x16xf32>
    %46 = arith.maximumf %44, %45 : vector<8x16xf32>
    %c0_27 = arith.constant 0 : index
    %c0_28 = arith.constant 0 : index
    %c32 = arith.constant 32 : index
    %47 = vector.load %arg6[%c0_27, %c0_28, %c32] : memref<1x8x128xf32, #tpu.memory_space<vmem>>, vector<1x8x16xf32>
    %48 = vector.shape_cast %47 : vector<1x8x16xf32> to vector<8x16xf32>
    %49 = vector.shape_cast %46 : vector<8x16xf32> to vector<1x8x16xf32>
    tpu.vector_store %arg6[%c0_27, %c0_28, %c32], %49 {strides = array<i32>} : memref<1x8x128xf32, #tpu.memory_space<vmem>>, vector<1x8x16xf32>,
    %c24 = arith.constant 24 : index
    %c0_29 = arith.constant 0 : index
    %50 = vector.load %arg7[%c24, %c0_29] : memref<80x18xf32, #tpu.memory_space<vmem>>, vector<24x18xf32>
    %cst_30 = arith.constant dense<0.000000e+00> : vector<24x18xf32>
    %51 = tpu.matmul %6, %50, %cst_30 {dimension_numbers = #tpu.dot_dimension_numbers<[1], [0], [0], [1], [0, 0, 1, 1], [], []>} : vector<24x24xf32>, vector<24x18xf32>, vector<24x18xf32> -> vector<24x18xf32>
    %52 = vector.extract_strided_slice %51 {offsets = [0, 0], sizes = [8, 16], strides = [1, 1]} : vector<24x18xf32> to vector<8x16xf32>
    %53 = vector.extract_strided_slice %51 {offsets = [8, 1], sizes = [8, 16], strides = [1, 1]} : vector<24x18xf32> to vector<8x16xf32>
    %54 = arith.addf %52, %53 : vector<8x16xf32>
    %55 = vector.extract_strided_slice %51 {offsets = [16, 2], sizes = [8, 16], strides = [1, 1]} : vector<24x18xf32> to vector<8x16xf32>
    %56 = arith.addf %54, %55 : vector<8x16xf32>
    %57 = vector.broadcast %7 : vector<8x1xf32> to vector<8x16xf32>
    %58 = arith.addf %56, %57 : vector<8x16xf32>
    %cst_31 = arith.constant 0.000000e+00 : f32
    %59 = vector.broadcast %cst_31 : f32 to vector<8x16xf32>
    %60 = arith.maximumf %58, %59 : vector<8x16xf32>
    %c0_32 = arith.constant 0 : index
    %c0_33 = arith.constant 0 : index
    %c48 = arith.constant 48 : index
    %61 = vector.load %arg6[%c0_32, %c0_33, %c48] : memref<1x8x128xf32, #tpu.memory_space<vmem>>, vector<1x8x16xf32>
    %62 = vector.shape_cast %61 : vector<1x8x16xf32> to vector<8x16xf32>
    %63 = vector.shape_cast %60 : vector<8x16xf32> to vector<1x8x16xf32>
    tpu.vector_store %arg6[%c0_32, %c0_33, %c48], %63 {strides = array<i32>} : memref<1x8x128xf32, #tpu.memory_space<vmem>>, vector<1x8x16xf32>,
    %c32_34 = arith.constant 32 : index
    %c0_35 = arith.constant 0 : index
    %64 = vector.load %arg7[%c32_34, %c0_35] : memref<80x18xf32, #tpu.memory_space<vmem>>, vector<24x18xf32>
    %cst_36 = arith.constant dense<0.000000e+00> : vector<24x18xf32>
    %65 = tpu.matmul %6, %64, %cst_36 {dimension_numbers = #tpu.dot_dimension_numbers<[1], [0], [0], [1], [0, 0, 1, 1], [], []>} : vector<24x24xf32>, vector<24x18xf32>, vector<24x18xf32> -> vector<24x18xf32>
    %66 = vector.extract_strided_slice %65 {offsets = [0, 0], sizes = [8, 16], strides = [1, 1]} : vector<24x18xf32> to vector<8x16xf32>
    %67 = vector.extract_strided_slice %65 {offsets = [8, 1], sizes = [8, 16], strides = [1, 1]} : vector<24x18xf32> to vector<8x16xf32>
    %68 = arith.addf %66, %67 : vector<8x16xf32>
    %69 = vector.extract_strided_slice %65 {offsets = [16, 2], sizes = [8, 16], strides = [1, 1]} : vector<24x18xf32> to vector<8x16xf32>
    %70 = arith.addf %68, %69 : vector<8x16xf32>
    %71 = vector.broadcast %7 : vector<8x1xf32> to vector<8x16xf32>
    %72 = arith.addf %70, %71 : vector<8x16xf32>
    %cst_37 = arith.constant 0.000000e+00 : f32
    %73 = vector.broadcast %cst_37 : f32 to vector<8x16xf32>
    %74 = arith.maximumf %72, %73 : vector<8x16xf32>
    %c0_38 = arith.constant 0 : index
    %c0_39 = arith.constant 0 : index
    %c64_40 = arith.constant 64 : index
    %75 = vector.load %arg6[%c0_38, %c0_39, %c64_40] : memref<1x8x128xf32, #tpu.memory_space<vmem>>, vector<1x8x16xf32>
    %76 = vector.shape_cast %75 : vector<1x8x16xf32> to vector<8x16xf32>
    %77 = vector.shape_cast %74 : vector<8x16xf32> to vector<1x8x16xf32>
    tpu.vector_store %arg6[%c0_38, %c0_39, %c64_40], %77 {strides = array<i32>} : memref<1x8x128xf32, #tpu.memory_space<vmem>>, vector<1x8x16xf32>,
    %c40 = arith.constant 40 : index
    %c0_41 = arith.constant 0 : index
    %78 = vector.load %arg7[%c40, %c0_41] : memref<80x18xf32, #tpu.memory_space<vmem>>, vector<24x18xf32>
    %cst_42 = arith.constant dense<0.000000e+00> : vector<24x18xf32>
    %79 = tpu.matmul %6, %78, %cst_42 {dimension_numbers = #tpu.dot_dimension_numbers<[1], [0], [0], [1], [0, 0, 1, 1], [], []>} : vector<24x24xf32>, vector<24x18xf32>, vector<24x18xf32> -> vector<24x18xf32>
    %80 = vector.extract_strided_slice %79 {offsets = [0, 0], sizes = [8, 16], strides = [1, 1]} : vector<24x18xf32> to vector<8x16xf32>
    %81 = vector.extract_strided_slice %79 {offsets = [8, 1], sizes = [8, 16], strides = [1, 1]} : vector<24x18xf32> to vector<8x16xf32>
    %82 = arith.addf %80, %81 : vector<8x16xf32>
    %83 = vector.extract_strided_slice %79 {offsets = [16, 2], sizes = [8, 16], strides = [1, 1]} : vector<24x18xf32> to vector<8x16xf32>
    %84 = arith.addf %82, %83 : vector<8x16xf32>
    %85 = vector.broadcast %7 : vector<8x1xf32> to vector<8x16xf32>
    %86 = arith.addf %84, %85 : vector<8x16xf32>
    %cst_43 = arith.constant 0.000000e+00 : f32
    %87 = vector.broadcast %cst_43 : f32 to vector<8x16xf32>
    %88 = arith.maximumf %86, %87 : vector<8x16xf32>
    %c0_44 = arith.constant 0 : index
    %c0_45 = arith.constant 0 : index
    %c80 = arith.constant 80 : index
    %89 = vector.load %arg6[%c0_44, %c0_45, %c80] : memref<1x8x128xf32, #tpu.memory_space<vmem>>, vector<1x8x16xf32>
    %90 = vector.shape_cast %89 : vector<1x8x16xf32> to vector<8x16xf32>
    %91 = vector.shape_cast %88 : vector<8x16xf32> to vector<1x8x16xf32>
    tpu.vector_store %arg6[%c0_44, %c0_45, %c80], %91 {strides = array<i32>} : memref<1x8x128xf32, #tpu.memory_space<vmem>>, vector<1x8x16xf32>,
    %c48_46 = arith.constant 48 : index
    %c0_47 = arith.constant 0 : index
    %92 = vector.load %arg7[%c48_46, %c0_47] : memref<80x18xf32, #tpu.memory_space<vmem>>, vector<24x18xf32>
    %cst_48 = arith.constant dense<0.000000e+00> : vector<24x18xf32>
    %93 = tpu.matmul %6, %92, %cst_48 {dimension_numbers = #tpu.dot_dimension_numbers<[1], [0], [0], [1], [0, 0, 1, 1], [], []>} : vector<24x24xf32>, vector<24x18xf32>, vector<24x18xf32> -> vector<24x18xf32>
    %94 = vector.extract_strided_slice %93 {offsets = [0, 0], sizes = [8, 16], strides = [1, 1]} : vector<24x18xf32> to vector<8x16xf32>
    %95 = vector.extract_strided_slice %93 {offsets = [8, 1], sizes = [8, 16], strides = [1, 1]} : vector<24x18xf32> to vector<8x16xf32>
    %96 = arith.addf %94, %95 : vector<8x16xf32>
    %97 = vector.extract_strided_slice %93 {offsets = [16, 2], sizes = [8, 16], strides = [1, 1]} : vector<24x18xf32> to vector<8x16xf32>
    %98 = arith.addf %96, %97 : vector<8x16xf32>
    %99 = vector.broadcast %7 : vector<8x1xf32> to vector<8x16xf32>
    %100 = arith.addf %98, %99 : vector<8x16xf32>
    %cst_49 = arith.constant 0.000000e+00 : f32
    %101 = vector.broadcast %cst_49 : f32 to vector<8x16xf32>
    %102 = arith.maximumf %100, %101 : vector<8x16xf32>
    %c0_50 = arith.constant 0 : index
    %c0_51 = arith.constant 0 : index
    %c96 = arith.constant 96 : index
    %103 = vector.load %arg6[%c0_50, %c0_51, %c96] : memref<1x8x128xf32, #tpu.memory_space<vmem>>, vector<1x8x16xf32>
    %104 = vector.shape_cast %103 : vector<1x8x16xf32> to vector<8x16xf32>
    %105 = vector.shape_cast %102 : vector<8x16xf32> to vector<1x8x16xf32>
    tpu.vector_store %arg6[%c0_50, %c0_51, %c96], %105 {strides = array<i32>} : memref<1x8x128xf32, #tpu.memory_space<vmem>>, vector<1x8x16xf32>,
    %c56 = arith.constant 56 : index
    %c0_52 = arith.constant 0 : index
    %106 = vector.load %arg7[%c56, %c0_52] : memref<80x18xf32, #tpu.memory_space<vmem>>, vector<24x18xf32>
    %cst_53 = arith.constant dense<0.000000e+00> : vector<24x18xf32>
    %107 = tpu.matmul %6, %106, %cst_53 {dimension_numbers = #tpu.dot_dimension_numbers<[1], [0], [0], [1], [0, 0, 1, 1], [], []>} : vector<24x24xf32>, vector<24x18xf32>, vector<24x18xf32> -> vector<24x18xf32>
    %108 = vector.extract_strided_slice %107 {offsets = [0, 0], sizes = [8, 16], strides = [1, 1]} : vector<24x18xf32> to vector<8x16xf32>
    %109 = vector.extract_strided_slice %107 {offsets = [8, 1], sizes = [8, 16], strides = [1, 1]} : vector<24x18xf32> to vector<8x16xf32>
    %110 = arith.addf %108, %109 : vector<8x16xf32>
    %111 = vector.extract_strided_slice %107 {offsets = [16, 2], sizes = [8, 16], strides = [1, 1]} : vector<24x18xf32> to vector<8x16xf32>
    %112 = arith.addf %110, %111 : vector<8x16xf32>
    %113 = vector.broadcast %7 : vector<8x1xf32> to vector<8x16xf32>
    %114 = arith.addf %112, %113 : vector<8x16xf32>
    %cst_54 = arith.constant 0.000000e+00 : f32
    %115 = vector.broadcast %cst_54 : f32 to vector<8x16xf32>
    %116 = arith.maximumf %114, %115 : vector<8x16xf32>
    %c0_55 = arith.constant 0 : index
    %c0_56 = arith.constant 0 : index
    %c112 = arith.constant 112 : index
    %117 = vector.load %arg6[%c0_55, %c0_56, %c112] : memref<1x8x128xf32, #tpu.memory_space<vmem>>, vector<1x8x16xf32>
    %118 = vector.shape_cast %117 : vector<1x8x16xf32> to vector<8x16xf32>
    %119 = vector.shape_cast %116 : vector<8x16xf32> to vector<1x8x16xf32>
    tpu.vector_store %arg6[%c0_55, %c0_56, %c112], %119 {strides = array<i32>} : memref<1x8x128xf32, #tpu.memory_space<vmem>>, vector<1x8x16xf32>,
    return
  }
  func.func @transform_0(%arg0: i32, %arg1: i32) -> (i32, i32) {
    %c0_i32 = arith.constant 0 : i32
    %c0_i32_0 = arith.constant 0 : i32
    %c0_i32_1 = arith.constant 0 : i32
    return %c0_i32, %c0_i32_0 : i32, i32
  }
  func.func @transform_1(%arg0: i32, %arg1: i32) -> (i32, i32) {
    %c0_i32 = arith.constant 0 : i32
    %c0_i32_0 = arith.constant 0 : i32
    %c0_i32_1 = arith.constant 0 : i32
    return %c0_i32, %c0_i32_0 : i32, i32
  }
  func.func @transform_2(%arg0: i32, %arg1: i32) -> (i32, i32, i32) {
    %c0_i32 = arith.constant 0 : i32
    %c0_i32_0 = arith.constant 0 : i32
    return %arg0, %arg1, %c0_i32 : i32, i32, i32
  }
  func.func @transform_3(%arg0: i32, %arg1: i32) -> (i32, i32, i32) {
    %c1_i32 = arith.constant 1 : i32
    %0 = arith.addi %arg1, %c1_i32 : i32
    %c4_i32 = arith.constant 4 : i32
    %1 = arith.muli %0, %c4_i32 : i32
    %c0_i32 = arith.constant 0 : i32
    %c0_i32_0 = arith.constant 0 : i32
    return %arg0, %1, %c0_i32 : i32, i32, i32
  }
  func.func @transform_4(%arg0: i32, %arg1: i32) -> (i32, i32, i32) {
    %c0_i32 = arith.constant 0 : i32
    %c0_i32_0 = arith.constant 0 : i32
    return %arg0, %c0_i32, %arg1 : i32, i32, i32
  }
}

</mosaic_0001>

<llo_original>
// kernel: tpu_custom_call.1
$region0: #{tpu_custom_call.1}
  #allocation0 [shape = 'u32[]', space=smem, size = 0x4, offset = 0x4, fixed_abs, tag = 'smem constant byte address 0x4 - core index']
  #allocation1 [shape = 'u32[144,128]{1,0:T(1,128)}', space=vmem, size = 0x12000, scoped, tag = 'internal scratch']
  #allocation2 [shape = 'f32[80,18]{1,0:T(8,128)}', space=vmem, size = 0xa000, scoped, tag = 'scratch operand']
  %s0 = inlined_call_operand.vmem [shape: f32[24,24], index: 0, kind: input, shape index: {}]
  %s1 = inlined_call_operand.vmem [shape: f32[8,1], index: 1, kind: input, shape index: {}]
  %s2 = inlined_call_operand.vmem [shape: f32[2,144,18], index: 2, kind: input, shape index: {}]
  %s3 = inlined_call_operand.vmem [shape: f32[2,144,18], index: 3, kind: input, shape index: {}]
  %s4 = inlined_call_operand.hbm [shape: f32[2,8,256], index: 4, kind: output, shape index: {}]
  %s5 = sld [smem:[#allocation0]]
  $region49: #{tpu_custom_call.1} parent=0
    _
  %s7 = ssub.s32 1, %s5
  %s8 = scalar_select 0, %s7, %s5
  $region1: #{tpu_custom_call.1} parent=0
    #allocation3 [shape = 'u8[8192]{0}', space=vmem, size = 0x2000, scoped, tag = 'output window, operand 0']
    #allocation4 [shape = 's32[2]{0}', space=sflag, size = 0x8, scoped, tag = 'scoped memory for tpu_custom_call.1']
    %9 = vsyncpa [#allocation4], 0
    %s10 = scalar_lea.sflag [#allocation4], 1
    %11 = vsyncpa %s10, 0
    loop: start=0, step=1, limit=6
    $region2: #{tpu_custom_call.1} parent=1 // loop_pre_header
      _
    $region3: #{tpu_custom_call.1} parent=1 // loop_header
      %s13 = sphi 0, %s17
      %p14 = scmp.ge.s32.totalorder %s13, 6
      %s20 = sphi 0, %s32
      %s21 = sphi 0, %s28
      %s22 = sphi 0, %s20
      %s23 = sphi 0, %s21
      %s24 = sphi 0, %s22
      %s25 = sphi 0, %s23
      %s33 = sphi 0, %s33
      %s35 = sphi 0, %s33
      %s36 = sphi 0, %s35
      %s50 = sphi 0, %s36
      %s54 = sphi 0, %s54
      %s56 = sphi 0, %s54
      %s57 = sphi 0, %s56
      %s71 = sphi 0, %s57
      %s79 = sphi 0, %s81
      %s82 = sphi 0, %s79
      %s83 = sphi 0, %s82
      %s99 = sphi 0, %s83
      %s111 = sphi 0, %s113
      %s114 = sphi 0, %s111
      %s115 = sphi 0, %s114
      %s131 = sphi 0, %s115
      %s139 = sphi 0, %s141
      %s142 = sphi 0, %s139
      %s143 = sphi 0, %s142
      %s159 = sphi 0, %s143
    $region4: #{tpu_custom_call.1} parent=1 // loop_header_branch
      %16 = sbr.rel (%p14) target = $region8
    $region5: #{tpu_custom_call.1} parent=1 // loop_body
      %s18 = ssub.s32 %s13, 1
      %s19 = ssub.s32 %s13, 2
      %s26 = sadd.s32 1, %s21
      %p27 = scmp.ge.s32.totalorder %s26, 2
      %s28 = scalar_select %p27, 0, %s26
      %s29 = sadd.s32 1, %s20
      %s30 = scalar_select %p27, %s29, %s20
      %p31 = scmp.ge.s32.totalorder %s30, 2
      %s32 = scalar_select %p31, 0, %s30
      %s34 = sadd.s32 %s33, 1
      %p37 = scmp.eq.s32.totalorder %s13, 3
      %p38 = scmp.ne.s32.totalorder %s33, %s35
      %p39 = scmp.eq.s32.totalorder %s13, 0
      %p40 = por %p38, %p39
      %p41 = scmp.ne.s32.totalorder %s33, %s35
      %p42 = scmp.eq.s32.totalorder %s18, 3
      %p43 = por %p41, %p42
      %p44 = scmp.ne.s32.totalorder %s35, %s36
      %p45 = scmp.eq.s32.totalorder %s18, 0
      %p46 = por %p44, %p45
      %p47 = scmp.ne.s32.totalorder %s35, %s36
      %p48 = scmp.eq.s32.totalorder %s19, 3
      %p49 = por %p47, %p48
      %p51 = scmp.ne.s32.totalorder %s36, %s50
      %p52 = scmp.eq.s32.totalorder %s19, 0
      %p53 = por %p51, %p52
      %s55 = sadd.s32 %s54, 1
      %p58 = scmp.eq.s32.totalorder %s13, 3
      %p59 = scmp.ne.s32.totalorder %s54, %s56
      %p60 = scmp.eq.s32.totalorder %s13, 0
      %p61 = por %p59, %p60
      %p62 = scmp.ne.s32.totalorder %s54, %s56
      %p63 = scmp.eq.s32.totalorder %s18, 3
      %p64 = por %p62, %p63
      %p65 = scmp.ne.s32.totalorder %s56, %s57
      %p66 = scmp.eq.s32.totalorder %s18, 0
      %p67 = por %p65, %p66
      %p68 = scmp.ne.s32.totalorder %s56, %s57
      %p69 = scmp.eq.s32.totalorder %s19, 3
      %p70 = por %p68, %p69
      %p72 = scmp.ne.s32.totalorder %s57, %s71
      %p73 = scmp.eq.s32.totalorder %s19, 0
      %p74 = por %p72, %p73
      %s75 = ssub.s32 %s20, %s32
      %s76 = ssub.s32 %s21, %s28
      %s77 = sor.u32 %s75, %s76
      %p78 = scmp.eq.s32.totalorder %s77, 0
      %s80 = sadd.s32 %s79, 1
      %s81 = scalar_select %p78, %s79, %s80
      %p84 = pneg %p78
      %p85 = scmp.eq.s32.totalorder %s13, 3
      %p86 = por %p84, %p85
      %p87 = scmp.ne.s32.totalorder %s79, %s82
      %p88 = scmp.eq.s32.totalorder %s13, 0
      %p89 = por %p87, %p88
      %p90 = scmp.ne.s32.totalorder %s79, %s82
      %p91 = scmp.eq.s32.totalorder %s18, 3
      %p92 = por %p90, %p91
      %p93 = scmp.ne.s32.totalorder %s82, %s83
      %p94 = scmp.eq.s32.totalorder %s18, 0
      %p95 = por %p93, %p94
      %p96 = scmp.ne.s32.totalorder %s82, %s83
      %p97 = scmp.eq.s32.totalorder %s19, 3
      %p98 = por %p96, %p97
      %p100 = scmp.ne.s32.totalorder %s83, %s99
      %p101 = scmp.eq.s32.totalorder %s19, 0
      %p102 = por %p100, %p101
      %s103 = sadd.s32 %s21, 1
      %s104 = smul.u32 %s103, 4
      %s105 = sadd.s32 %s28, 1
      %s106 = smul.u32 %s105, 4
      %s107 = ssub.s32 %s20, %s32
      %s108 = ssub.s32 %s104, %s106
      %s109 = sor.u32 %s107, %s108
      %p110 = scmp.eq.s32.totalorder %s109, 0
      %s112 = sadd.s32 %s111, 1
      %s113 = scalar_select %p110, %s111, %s112
      %p116 = pneg %p110
      %p117 = scmp.eq.s32.totalorder %s13, 3
      %p118 = por %p116, %p117
      %p119 = scmp.ne.s32.totalorder %s111, %s114
      %p120 = scmp.eq.s32.totalorder %s13, 0
      %p121 = por %p119, %p120
      %p122 = scmp.ne.s32.totalorder %s111, %s114
      %p123 = scmp.eq.s32.totalorder %s18, 3
      %p124 = por %p122, %p123
      %p125 = scmp.ne.s32.totalorder %s114, %s115
      %p126 = scmp.eq.s32.totalorder %s18, 0
      %p127 = por %p125, %p126
      %p128 = scmp.ne.s32.totalorder %s114, %s115
      %p129 = scmp.eq.s32.totalorder %s19, 3
      %p130 = por %p128, %p129
      %p132 = scmp.ne.s32.totalorder %s115, %s131
      %p133 = scmp.eq.s32.totalorder %s19, 0
      %p134 = por %p132, %p133
      %s135 = ssub.s32 %s20, %s32
      %s136 = ssub.s32 %s21, %s28
      %s137 = sor.u32 %s135, %s136
      %p138 = scmp.eq.s32.totalorder %s137, 0
      %s140 = sadd.s32 %s139, 1
      %s141 = scalar_select %p138, %s139, %s140
      %p144 = pneg %p138
      %p145 = scmp.eq.s32.totalorder %s13, 3
      %p146 = por %p144, %p145
      %p147 = scmp.ne.s32.totalorder %s139, %s142
      %p148 = scmp.eq.s32.totalorder %s13, 0
      %p149 = por %p147, %p148
      %p150 = scmp.ne.s32.totalorder %s139, %s142
      %p151 = scmp.eq.s32.totalorder %s18, 3
      %p152 = por %p150, %p151
      %p153 = scmp.ne.s32.totalorder %s142, %s143
      %p154 = scmp.eq.s32.totalorder %s18, 0
      %p155 = por %p153, %p154
      %p156 = scmp.ne.s32.totalorder %s142, %s143
      %p157 = scmp.eq.s32.totalorder %s19, 3
      %p158 = por %p156, %p157
      %p160 = scmp.ne.s32.totalorder %s143, %s159
      %p161 = scmp.eq.s32.totalorder %s19, 0
      %p162 = por %p160, %p161
      %p163 = scmp.le.s32.totalorder 1, %s13
      %p164 = scmp.lt.s32.totalorder %s13, 5
      %p165 = pnand %p163, %p164
      %p166 = pneg %p165
      // Predicated region
      $region9: #{tpu_custom_call.1} parent=5 // pred_check
        _
      $region10: #{tpu_custom_call.1} parent=5 // pred_check_branch
        %168 = sbr.rel (%p165) target = $region12
      $region11: #{tpu_custom_call.1} parent=5 // pred_region
        %s169 = ssub.s32 %s13, 1
        // Predicated region
        $region13: #{tpu_custom_call.1} parent=11 // pred_check
          %p170 = pneg %p46
        $region14: #{tpu_custom_call.1} parent=11 // pred_check_branch
          %172 = sbr.rel (%p170) target = $region16
        $region15: #{tpu_custom_call.1} parent=11 // pred_region
          _
        $region16: #{tpu_custom_call.1} parent=11 // pred_fallthru
          _
        // Predicated region
        $region17: #{tpu_custom_call.1} parent=11 // pred_check
          %p173 = pneg %p67
        $region18: #{tpu_custom_call.1} parent=11 // pred_check_branch
          %175 = sbr.rel (%p173) target = $region20
        $region19: #{tpu_custom_call.1} parent=11 // pred_region
          _
        $region20: #{tpu_custom_call.1} parent=11 // pred_fallthru
          _
      $region12: #{tpu_custom_call.1} parent=5 // pred_fallthru
        _
      %p176 = scmp.lt.s32.totalorder %s13, 4
      // Predicated region
      $region21: #{tpu_custom_call.1} parent=5 // pred_check
        %p177 = pneg %p176
      $region22: #{tpu_custom_call.1} parent=5 // pred_check_branch
        %179 = sbr.rel (%p177) target = $region24
      $region23: #{tpu_custom_call.1} parent=5 // pred_region
        // Predicated region
        $region25: #{tpu_custom_call.1} parent=23 // pred_check
          %p180 = pneg %p89
        $region26: #{tpu_custom_call.1} parent=23 // pred_check_branch
          %182 = sbr.rel (%p180) target = $region28
        $region27: #{tpu_custom_call.1} parent=23 // pred_region
          %s183 = smul.u32 8, %s21
          %s184 = ssub.s32 18, %s183
          %p185 = scmp.lt.s32.totalorder %s184, 8
          %s186 = scalar_select %p185, %s184, 8
          %s187 = smul.u32 128, %s186
          %p188 = scmp.lt.s32.totalorder %s20, 1
          %s189 = scalar_select %p188, %s20, 1
          %p190 = scmp.lt.s32.totalorder %s183, 17
          %s191 = scalar_select %p190, %s183, 17
          %s192 = smul.addr %s189, 18
          %s193 = sadd.s32 %s191, %s192
          %s194 = smul.addr %s193, 8
          %s195 = scalar_lea.vmem %s2, %s194
          %s196 = smul.u32 8, %s21
          %s197 = ssub.s32 18, %s196
          %p198 = scmp.lt.s32.totalorder %s197, 8
          %s199 = scalar_select %p198, %s197, 8
          %s200 = smul.u32 128, %s199
        $region28: #{tpu_custom_call.1} parent=23 // pred_fallthru
          _
        // Predicated region
        $region29: #{tpu_custom_call.1} parent=23 // pred_check
          %p201 = pneg %p121
        $region30: #{tpu_custom_call.1} parent=23 // pred_check_branch
          %203 = sbr.rel (%p201) target = $region32
        $region31: #{tpu_custom_call.1} parent=23 // pred_region
          %s204 = sadd.s32 %s21, 1
          %s205 = smul.u32 %s204, 4
          %s206 = smul.u32 2, %s205
          %p207 = scmp.lt.s32.totalorder %s20, 1
          %s208 = scalar_select %p207, %s20, 1
          %p209 = scmp.lt.s32.totalorder %s206, 17
          %s210 = scalar_select %p209, %s206, 17
          %s211 = smul.addr %s208, 18
          %s212 = sadd.s32 %s210, %s211
          %s213 = smul.addr %s212, 8
          %s214 = scalar_lea.vmem %s3, %s213
          %s215 = sadd.s32 %s21, 1
          %s216 = smul.u32 %s215, 4
          %s217 = smul.u32 2, %s216
        $region32: #{tpu_custom_call.1} parent=23 // pred_fallthru
          _
      $region24: #{tpu_custom_call.1} parent=5 // pred_fallthru
        _
      %p218 = scmp.le.s32.totalorder 1, %s13
      %p219 = scmp.lt.s32.totalorder %s13, 5
      %p220 = pnand %p218, %p219
      %p221 = pneg %p220
      // Predicated region
      $region33: #{tpu_custom_call.1} parent=5 // pred_check
        _
      $region34: #{tpu_custom_call.1} parent=5 // pred_check_branch
        %223 = sbr.rel (%p220) target = $region36
      $region35: #{tpu_custom_call.1} parent=5 // pred_region
        %s224 = ssub.s32 %s13, 1
        %p225 = pneg %p46
        %p226 = pneg %p43
        %p227 = pneg %p67
        %p228 = pneg %p64
        %s229 = smul.u32 8, %s23
        %s230 = ssub.s32 18, %s229
        %p231 = scmp.lt.s32.totalorder %s230, 8
        %s232 = scalar_select %p231, %s230, 8
        %s233 = smul.u32 128, %s232
        %p234 = scmp.lt.s32.totalorder %s22, 1
        %s235 = scalar_select %p234, %s22, 1
        %p236 = scmp.lt.s32.totalorder %s229, 17
        %s237 = scalar_select %p236, %s229, 17
        %s238 = smul.addr %s235, 18
        %s239 = sadd.s32 %s237, %s238
        %s240 = smul.addr %s239, 8
        %s241 = scalar_lea.vmem %s2, %s240
        %p242 = pneg %p95
        %p243 = pneg %p92
        %s244 = sadd.s32 %s23, 1
        %s245 = smul.u32 %s244, 4
        %s246 = smul.u32 2, %s245
        %p247 = scmp.lt.s32.totalorder %s22, 1
        %s248 = scalar_select %p247, %s22, 1
        %p249 = scmp.lt.s32.totalorder %s246, 17
        %s250 = scalar_select %p249, %s246, 17
        %s251 = smul.addr %s248, 18
        %s252 = sadd.s32 %s250, %s251
        %s253 = smul.addr %s252, 8
        %s254 = scalar_lea.vmem %s3, %s253
        %p255 = pneg %p127
        %p256 = pneg %p124
        %p257 = pneg %p155
        %p258 = pneg %p152
        %s259 = sand.u32 %s142, 1
        %s260 = scalar_lea.sflag [#allocation4], %s259
        %s261 = sand.u32 %s142, 1
        %s262 = smul.addr %s261, 8
        %s263 = scalar_lea.vmem [#allocation3], %s262
        %s264 = smul.u32 8, %s23
        %s265 = ssub.s32 18, %s264
        %p266 = scmp.lt.s32.totalorder %s265, 8
        %s267 = scalar_select %p266, %s265, 8
        %s268 = smul.u32 128, %s267
        %p269 = scmp.lt.s32.totalorder %s22, 1
        %s270 = scalar_select %p269, %s22, 1
        %p271 = scmp.lt.s32.totalorder %s264, 17
        %s272 = scalar_select %p271, %s264, 17
        %s273 = smul.addr %s270, 18
        %s274 = sadd.s32 %s272, %s273
        %s275 = smul.addr %s274, 8
        %s276 = scalar_lea.vmem %s2, %s275
        %s277 = smul.u32 8, %s23
        %s278 = ssub.s32 18, %s277
        %p279 = scmp.lt.s32.totalorder %s278, 8
        %s280 = scalar_select %p279, %s278, 8
        %s281 = smul.u32 128, %s280
        %s282 = sadd.s32 %s23, 1
        %s283 = smul.u32 %s282, 4
        %s284 = smul.u32 2, %s283
        %p285 = scmp.lt.s32.totalorder %s22, 1
        %s286 = scalar_select %p285, %s22, 1
        %p287 = scmp.lt.s32.totalorder %s284, 17
        %s288 = scalar_select %p287, %s284, 17
        %s289 = smul.addr %s286, 18
        %s290 = sadd.s32 %s288, %s289
        %s291 = smul.addr %s290, 8
        %s292 = scalar_lea.vmem %s3, %s291
        %s293 = sadd.s32 %s23, 1
        %s294 = smul.u32 %s293, 4
        %s295 = smul.u32 2, %s294
        %v296 = vld [vmem:[%s276] sm:$0xff]
        %v297 = vld [vmem:[%s276 + $0x8] sm:$0xff]
        %v298 = vld [vmem:[%s276 + $0x10] sm:$0xff]
        %v299 = vld [vmem:[%s276 + $0x18] sm:$0xff]
        %v300 = vld [vmem:[%s276 + $0x20] sm:$0xff]
        %v301 = vld [vmem:[%s276 + $0x28] sm:$0xff]
        %v302 = vld [vmem:[%s276 + $0x30] sm:$0xff]
        %v303 = vld [vmem:[%s276 + $0x38] sm:$0xff]
        %vm304 = vcmask 146432
        %305 = vst.msk [vmem:[#allocation2] sm:$0xff] %vm304, %v296
        %306 = vst.msk [vmem:[#allocation2 + $0x8] sm:$0xff] %vm304, %v297
        %307 = vst.msk [vmem:[#allocation2 + $0x10] sm:$0xff] %vm304, %v298
        %308 = vst.msk [vmem:[#allocation2 + $0x18] sm:$0xff] %vm304, %v299
        %309 = vst.msk [vmem:[#allocation2 + $0x20] sm:$0xff] %vm304, %v300
        %310 = vst.msk [vmem:[#allocation2 + $0x28] sm:$0xff] %vm304, %v301
        %311 = vst.msk [vmem:[#allocation2 + $0x30] sm:$0xff] %vm304, %v302
        %312 = vst.msk [vmem:[#allocation2 + $0x38] sm:$0xff] %vm304, %v303
        %v313 = vld [vmem:[%s292] sm:$0xff]
        %v314 = vld [vmem:[%s292 + $0x8] sm:$0xff]
        %315 = vst.msk [vmem:[#allocation2 + $0x40] sm:$0xff] %vm304, %v313
        %316 = vst.msk [vmem:[#allocation2 + $0x48] sm:$0xff] %vm304, %v314
        %v317 = vld [vmem:[%s0] sm:$0xff]
        %v318 = vld [vmem:[%s0 + $0x8] sm:$0xff]
        %v319 = vld [vmem:[%s0 + $0x10] sm:$0xff]
        %v320 = vld [vmem:[%s1] sm:$0xff]
        %v321 = vld [vmem:[#allocation2] sm:$0xff]
        %v322 = vld [vmem:[#allocation2 + $0x8] sm:$0xff]
        %v323 = vld [vmem:[#allocation2 + $0x10] sm:$0xff]
        %vm324 = vcmask 195584
        %v326 = vsel %vm324, %v317, 0
        %v329 = vsel %vm324, %v318, 0
        %v332 = vsel %vm324, %v319, 0
        %334 = vmatprep.subr.mxu0 0.0
        %335 = vmatpush1.msra.mxu0 %v321
        %336 = vmatprep.subr.mxu0 0.0
        %337 = vmatpush1.msra.mxu0 %v322
        %338 = vmatprep.subr.mxu0 0.0
        %339 = vmatpush1.msra.mxu0 %v323
        %340 = vmatprep.subr.mxu0 0.0
        %341 = vmatpush1.msra.mxu0 0.0
        %342 = vmatprep.subr.mxu0 0.0
        %343 = vmatpush1.msra.mxu0 0.0
        %344 = vmatprep.subr.mxu0 0.0
        %345 = vmatpush1.msra.mxu0 0.0
        %346 = vmatprep.subr.mxu0 0.0
        %347 = vmatpush1.msra.mxu0 0.0
        %348 = vmatprep.subr.mxu0 0.0
        %349 = vmatpush1.msra.mxu0 0.0
        %350 = vmatprep.subr.mxu0 0.0
        %351 = vmatpush1.msra.mxu0 0.0
        %352 = vmatprep.subr.mxu0 0.0
        %353 = vmatpush1.msra.mxu0 0.0
        %354 = vmatprep.subr.mxu0 0.0
        %355 = vmatpush1.msra.mxu0 0.0
        %356 = vmatprep.subr.mxu0 0.0
        %357 = vmatpush1.msra.mxu0 0.0
        %358 = vmatprep.subr.mxu0 0.0
        %359 = vmatpush1.msra.mxu0 0.0
        %360 = vmatprep.subr.mxu0 0.0
        %361 = vmatpush1.msra.mxu0 0.0
        %362 = vmatprep.subr.mxu0 0.0
        %363 = vmatpush1.msra.mxu0 0.0
        %364 = vmatprep.subr.mxu0 0.0
        %365 = vmatpush1.msra.mxu0 0.0
        %366 = vmatprep.subr.mxu0 0.0
        %367 = vmatpush1.msra.mxu0 0.0
        %368 = vmatprep.subr.mxu0 0.0
        %369 = vmatpush1.msra.mxu0 0.0
        %370 = vmatprep.subr.mxu0 0.0
        %371 = vmatpush1.msra.mxu0 0.0
        %372 = vmatprep.subr.mxu0 0.0
        %373 = vmatpush1.msra.mxu0 0.0
        %374 = vmatprep.subr.mxu0 0.0
        %375 = vmatpush1.msra.mxu0 0.0
        %376 = vmatprep.subr.mxu0 0.0
        %377 = vmatpush1.msra.mxu0 0.0
        %378 = vmatprep.subr.mxu0 0.0
        %379 = vmatpush1.msra.mxu0 0.0
        %380 = vmatprep.subr.mxu0 0.0
        %381 = vmatpush1.msra.mxu0 0.0
        %382 = vmatprep.subr.mxu0 0.0
        %383 = vmatpush1.msra.mxu0 0.0
        %384 = vmatprep.subr.mxu0 0.0
        %385 = vmatpush1.msra.mxu0 0.0
        %386 = vmatprep.subr.mxu0 0.0
        %387 = vmatpush1.msra.mxu0 0.0
        %388 = vmatprep.subr.mxu0 0.0
        %389 = vmatpush1.msra.mxu0 0.0
        %390 = vmatprep.subr.mxu0 0.0
        %391 = vmatpush1.msra.mxu0 0.0
        %392 = vmatprep.subr.mxu0 0.0
        %393 = vmatpush1.msra.mxu0 0.0
        %394 = vmatprep.subr.mxu0 0.0
        %395 = vmatpush1.msra.mxu0 0.0
        %396 = vmatprep.subr.mxu0 0.0
        %397 = vmatpush1.msra.mxu0 0.0
        %398 = vmatprep.mubr.f32.mxu0 0.0
        %399 = vmatmul.mubr.f32.gmra.mrb[0].mxu0 %v326
        %v400 = vpop.f32.mrb[0].mxu0
        %v401 = vadd.f32 0.0, %v400
        %v402 = vpop.f32.mrb[0].mxu0
        %403 = vmatprep.mubr.f32.mxu0 0.0
        %404 = vmatmul.mubr.f32.gmra.mrb[0].mxu0 %v329
        %v405 = vpop.f32.mrb[0].mxu0
        %v406 = vadd.f32 0.0, %v405
        %v407 = vpop.f32.mrb[0].mxu0
        %408 = vmatprep.mubr.f32.mxu0 0.0
        %409 = vmatmul.mubr.f32.gmra.mrb[0].mxu0 %v332
        %v410 = vpop.f32.mrb[0].mxu0
        %v411 = vadd.f32 0.0, %v410
        %v412 = vpop.f32.mrb[0].mxu0
        %413 = vdwg.mxu0
        %415 = vrot.lane.b32.xlu0 %v406, 127
        %v416 = vpop.permute.xlu0 %415
        %v418 = vadd.f32 %v401, %v416
        %420 = vrot.lane.b32.xlu0 %v411, 126
        %v421 = vpop.permute.xlu0 %420
        %v423 = vadd.f32 %v418, %v421
        %425 = vset.pattern.permute.xlu0 0
        %426 = vperm.xlu0 %425, %v320
        %v427 = vpop.permute.xlu0 %426
        %v429 = vadd.f32 %v423, %v427
        %v430 = vmax.f32 %v429, 0.0
        %vm431 = vcmask 130048
        %432 = vst.msk [vmem:[%s263] sm:$0xff] %vm431, %v430
        %v433 = vld [vmem:[#allocation2 + $0x8] sm:$0xff]
        %v434 = vld [vmem:[#allocation2 + $0x10] sm:$0xff]
        %v435 = vld [vmem:[#allocation2 + $0x18] sm:$0xff]
        %436 = vmatprep.subr.mxu0 0.0
        %437 = vmatpush1.msra.mxu0 %v433
        %438 = vmatprep.subr.mxu0 0.0
        %439 = vmatpush1.msra.mxu0 %v434
        %440 = vmatprep.subr.mxu0 0.0
        %441 = vmatpush1.msra.mxu0 %v435
        %442 = vmatprep.subr.mxu0 0.0
        %443 = vmatpush1.msra.mxu0 0.0
        %444 = vmatprep.subr.mxu0 0.0
        %445 = vmatpush1.msra.mxu0 0.0
        %446 = vmatprep.subr.mxu0 0.0
        %447 = vmatpush1.msra.mxu0 0.0
        %448 = vmatprep.subr.mxu0 0.0
        %449 = vmatpush1.msra.mxu0 0.0
        %450 = vmatprep.subr.mxu0 0.0
        %451 = vmatpush1.msra.mxu0 0.0
        %452 = vmatprep.subr.mxu0 0.0
        %453 = vmatpush1.msra.mxu0 0.0
        %454 = vmatprep.subr.mxu0 0.0
        %455 = vmatpush1.msra.mxu0 0.0
        %456 = vmatprep.subr.mxu0 0.0
        %457 = vmatpush1.msra.mxu0 0.0
        %458 = vmatprep.subr.mxu0 0.0
        %459 = vmatpush1.msra.mxu0 0.0
        %460 = vmatprep.subr.mxu0 0.0
        %461 = vmatpush1.msra.mxu0 0.0
        %462 = vmatprep.subr.mxu0 0.0
        %463 = vmatpush1.msra.mxu0 0.0
        %464 = vmatprep.subr.mxu0 0.0
        %465 = vmatpush1.msra.mxu0 0.0
        %466 = vmatprep.subr.mxu0 0.0
        %467 = vmatpush1.msra.mxu0 0.0
        %468 = vmatprep.subr.mxu0 0.0
        %469 = vmatpush1.msra.mxu0 0.0
        %470 = vmatprep.subr.mxu0 0.0
        %471 = vmatpush1.msra.mxu0 0.0
        %472 = vmatprep.subr.mxu0 0.0
        %473 = vmatpush1.msra.mxu0 0.0
        %474 = vmatprep.subr.mxu0 0.0
        %475 = vmatpush1.msra.mxu0 0.0
        %476 = vmatprep.subr.mxu0 0.0
        %477 = vmatpush1.msra.mxu0 0.0
        %478 = vmatprep.subr.mxu0 0.0
        %479 = vmatpush1.msra.mxu0 0.0
        %480 = vmatprep.subr.mxu0 0.0
        %481 = vmatpush1.msra.mxu0 0.0
        %482 = vmatprep.subr.mxu0 0.0
        %483 = vmatpush1.msra.mxu0 0.0
        %484 = vmatprep.subr.mxu0 0.0
        %485 = vmatpush1.msra.mxu0 0.0
        %486 = vmatprep.subr.mxu0 0.0
        %487 = vmatpush1.msra.mxu0 0.0
        %488 = vmatprep.subr.mxu0 0.0
        %489 = vmatpush1.msra.mxu0 0.0
        %490 = vmatprep.subr.mxu0 0.0
        %491 = vmatpush1.msra.mxu0 0.0
        %492 = vmatprep.subr.mxu0 0.0
        %493 = vmatpush1.msra.mxu0 0.0
        %494 = vmatprep.subr.mxu0 0.0
        %495 = vmatpush1.msra.mxu0 0.0
        %496 = vmatprep.subr.mxu0 0.0
        %497 = vmatpush1.msra.mxu0 0.0
        %498 = vmatprep.subr.mxu0 0.0
        %499 = vmatpush1.msra.mxu0 0.0
        %500 = vmatprep.mubr.f32.mxu0 0.0
        %501 = vmatmul.mubr.f32.gmra.mrb[0].mxu0 %v326
        %v502 = vpop.f32.mrb[0].mxu0
        %v503 = vadd.f32 0.0, %v502
        %v504 = vpop.f32.mrb[0].mxu0
        %505 = vmatprep.mubr.f32.mxu0 0.0
        %506 = vmatmul.mubr.f32.gmra.mrb[0].mxu0 %v329
        %v507 = vpop.f32.mrb[0].mxu0
        %v508 = vadd.f32 0.0, %v507
        %v509 = vpop.f32.mrb[0].mxu0
        %510 = vmatprep.mubr.f32.mxu0 0.0
        %511 = vmatmul.mubr.f32.gmra.mrb[0].mxu0 %v332
        %v512 = vpop.f32.mrb[0].mxu0
        %v513 = vadd.f32 0.0, %v512
        %v514 = vpop.f32.mrb[0].mxu0
        %515 = vdwg.mxu0
        %517 = vrot.lane.b32.xlu0 %v508, 127
        %v518 = vpop.permute.xlu0 %517
        %v520 = vadd.f32 %v503, %v518
        %522 = vrot.lane.b32.xlu0 %v513, 126
        %v523 = vpop.permute.xlu0 %522
        %v525 = vadd.f32 %v520, %v523
        %v526 = vadd.f32 %v525, %v427
        %v527 = vmax.f32 %v526, 0.0
        %529 = vrot.lane.b32.xlu0 %v527, 16
        %v530 = vpop.permute.xlu0 %529
        %vm532 = vcmask 261248
        %533 = vst.msk [vmem:[%s263] sm:$0xff] %vm532, %v530
        %v534 = vld [vmem:[#allocation2 + $0x10] sm:$0xff]
        %v535 = vld [vmem:[#allocation2 + $0x18] sm:$0xff]
        %v536 = vld [vmem:[#allocation2 + $0x20] sm:$0xff]
        %537 = vmatprep.subr.mxu0 0.0
        %538 = vmatpush1.msra.mxu0 %v534
        %539 = vmatprep.subr.mxu0 0.0
        %540 = vmatpush1.msra.mxu0 %v535
        %541 = vmatprep.subr.mxu0 0.0
        %542 = vmatpush1.msra.mxu0 %v536
        %543 = vmatprep.subr.mxu0 0.0
        %544 = vmatpush1.msra.mxu0 0.0
        %545 = vmatprep.subr.mxu0 0.0
        %546 = vmatpush1.msra.mxu0 0.0
        %547 = vmatprep.subr.mxu0 0.0
        %548 = vmatpush1.msra.mxu0 0.0
        %549 = vmatprep.subr.mxu0 0.0
        %550 = vmatpush1.msra.mxu0 0.0
        %551 = vmatprep.subr.mxu0 0.0
        %552 = vmatpush1.msra.mxu0 0.0
        %553 = vmatprep.subr.mxu0 0.0
        %554 = vmatpush1.msra.mxu0 0.0
        %555 = vmatprep.subr.mxu0 0.0
        %556 = vmatpush1.msra.mxu0 0.0
        %557 = vmatprep.subr.mxu0 0.0
        %558 = vmatpush1.msra.mxu0 0.0
        %559 = vmatprep.subr.mxu0 0.0
        %560 = vmatpush1.msra.mxu0 0.0
        %561 = vmatprep.subr.mxu0 0.0
        %562 = vmatpush1.msra.mxu0 0.0
        %563 = vmatprep.subr.mxu0 0.0
        %564 = vmatpush1.msra.mxu0 0.0
        %565 = vmatprep.subr.mxu0 0.0
        %566 = vmatpush1.msra.mxu0 0.0
        %567 = vmatprep.subr.mxu0 0.0
        %568 = vmatpush1.msra.mxu0 0.0
        %569 = vmatprep.subr.mxu0 0.0
        %570 = vmatpush1.msra.mxu0 0.0
        %571 = vmatprep.subr.mxu0 0.0
        %572 = vmatpush1.msra.mxu0 0.0
        %573 = vmatprep.subr.mxu0 0.0
        %574 = vmatpush1.msra.mxu0 0.0
        %575 = vmatprep.subr.mxu0 0.0
        %576 = vmatpush1.msra.mxu0 0.0
        %577 = vmatprep.subr.mxu0 0.0
        %578 = vmatpush1.msra.mxu0 0.0
        %579 = vmatprep.subr.mxu0 0.0
        %580 = vmatpush1.msra.mxu0 0.0
        %581 = vmatprep.subr.mxu0 0.0
        %582 = vmatpush1.msra.mxu0 0.0
        %583 = vmatprep.subr.mxu0 0.0
        %584 = vmatpush1.msra.mxu0 0.0
        %585 = vmatprep.subr.mxu0 0.0
        %586 = vmatpush1.msra.mxu0 0.0
        %587 = vmatprep.subr.mxu0 0.0
        %588 = vmatpush1.msra.mxu0 0.0
        %589 = vmatprep.subr.mxu0 0.0
        %590 = vmatpush1.msra.mxu0 0.0
        %591 = vmatprep.subr.mxu0 0.0
        %592 = vmatpush1.msra.mxu0 0.0
        %593 = vmatprep.subr.mxu0 0.0
        %594 = vmatpush1.msra.mxu0 0.0
        %595 = vmatprep.subr.mxu0 0.0
        %596 = vmatpush1.msra.mxu0 0.0
        %597 = vmatprep.subr.mxu0 0.0
        %598 = vmatpush1.msra.mxu0 0.0
        %599 = vmatprep.subr.mxu0 0.0
        %600 = vmatpush1.msra.mxu0 0.0
        %601 = vmatprep.mubr.f32.mxu0 0.0
        %602 = vmatmul.mubr.f32.gmra.mrb[0].mxu0 %v326
        %v603 = vpop.f32.mrb[0].mxu0
        %v604 = vadd.f32 0.0, %v603
        %v605 = vpop.f32.mrb[0].mxu0
        %606 = vmatprep.mubr.f32.mxu0 0.0
        %607 = vmatmul.mubr.f32.gmra.mrb[0].mxu0 %v329
        %v608 = vpop.f32.mrb[0].mxu0
        %v609 = vadd.f32 0.0, %v608
        %v610 = vpop.f32.mrb[0].mxu0
        %611 = vmatprep.mubr.f32.mxu0 0.0
        %612 = vmatmul.mubr.f32.gmra.mrb[0].mxu0 %v332
        %v613 = vpop.f32.mrb[0].mxu0
        %v614 = vadd.f32 0.0, %v613
        %v615 = vpop.f32.mrb[0].mxu0
        %616 = vdwg.mxu0
        %618 = vrot.lane.b32.xlu0 %v609, 127
        %v619 = vpop.permute.xlu0 %618
        %v621 = vadd.f32 %v604, %v619
        %623 = vrot.lane.b32.xlu0 %v614, 126
        %v624 = vpop.permute.xlu0 %623
        %v626 = vadd.f32 %v621, %v624
        %v627 = vadd.f32 %v626, %v427
        %v628 = vmax.f32 %v627, 0.0
        %630 = vrot.lane.b32.xlu0 %v628, 32
        %v631 = vpop.permute.xlu0 %630
        %vm633 = vcmask 392448
        %634 = vst.msk [vmem:[%s263] sm:$0xff] %vm633, %v631
        %v635 = vld [vmem:[#allocation2 + $0x18] sm:$0xff]
        %v636 = vld [vmem:[#allocation2 + $0x20] sm:$0xff]
        %v637 = vld [vmem:[#allocation2 + $0x28] sm:$0xff]
        %638 = vmatprep.subr.mxu0 0.0
        %639 = vmatpush1.msra.mxu0 %v635
        %640 = vmatprep.subr.mxu0 0.0
        %641 = vmatpush1.msra.mxu0 %v636
        %642 = vmatprep.subr.mxu0 0.0
        %643 = vmatpush1.msra.mxu0 %v637
        %644 = vmatprep.subr.mxu0 0.0
        %645 = vmatpush1.msra.mxu0 0.0
        %646 = vmatprep.subr.mxu0 0.0
        %647 = vmatpush1.msra.mxu0 0.0
        %648 = vmatprep.subr.mxu0 0.0
        %649 = vmatpush1.msra.mxu0 0.0
        %650 = vmatprep.subr.mxu0 0.0
        %651 = vmatpush1.msra.mxu0 0.0
        %652 = vmatprep.subr.mxu0 0.0
        %653 = vmatpush1.msra.mxu0 0.0
        %654 = vmatprep.subr.mxu0 0.0
        %655 = vmatpush1.msra.mxu0 0.0
        %656 = vmatprep.subr.mxu0 0.0
        %657 = vmatpush1.msra.mxu0 0.0
        %658 = vmatprep.subr.mxu0 0.0
        %659 = vmatpush1.msra.mxu0 0.0
        %660 = vmatprep.subr.mxu0 0.0
        %661 = vmatpush1.msra.mxu0 0.0
        %662 = vmatprep.subr.mxu0 0.0
        %663 = vmatpush1.msra.mxu0 0.0
        %664 = vmatprep.subr.mxu0 0.0
        %665 = vmatpush1.msra.mxu0 0.0
        %666 = vmatprep.subr.mxu0 0.0
        %667 = vmatpush1.msra.mxu0 0.0
        %668 = vmatprep.subr.mxu0 0.0
        %669 = vmatpush1.msra.mxu0 0.0
        %670 = vmatprep.subr.mxu0 0.0
        %671 = vmatpush1.msra.mxu0 0.0
        %672 = vmatprep.subr.mxu0 0.0
        %673 = vmatpush1.msra.mxu0 0.0
        %674 = vmatprep.subr.mxu0 0.0
        %675 = vmatpush1.msra.mxu0 0.0
        %676 = vmatprep.subr.mxu0 0.0
        %677 = vmatpush1.msra.mxu0 0.0
        %678 = vmatprep.subr.mxu0 0.0
        %679 = vmatpush1.msra.mxu0 0.0
        %680 = vmatprep.subr.mxu0 0.0
        %681 = vmatpush1.msra.mxu0 0.0
        %682 = vmatprep.subr.mxu0 0.0
        %683 = vmatpush1.msra.mxu0 0.0
        %684 = vmatprep.subr.mxu0 0.0
        %685 = vmatpush1.msra.mxu0 0.0
        %686 = vmatprep.subr.mxu0 0.0
        %687 = vmatpush1.msra.mxu0 0.0
        %688 = vmatprep.subr.mxu0 0.0
        %689 = vmatpush1.msra.mxu0 0.0
        %690 = vmatprep.subr.mxu0 0.0
        %691 = vmatpush1.msra.mxu0 0.0
        %692 = vmatprep.subr.mxu0 0.0
        %693 = vmatpush1.msra.mxu0 0.0
        %694 = vmatprep.subr.mxu0 0.0
        %695 = vmatpush1.msra.mxu0 0.0
        %696 = vmatprep.subr.mxu0 0.0
        %697 = vmatpush1.msra.mxu0 0.0
        %698 = vmatprep.subr.mxu0 0.0
        %699 = vmatpush1.msra.mxu0 0.0
        %700 = vmatprep.subr.mxu0 0.0
        %701 = vmatpush1.msra.mxu0 0.0
        %702 = vmatprep.mubr.f32.mxu0 0.0
        %703 = vmatmul.mubr.f32.gmra.mrb[0].mxu0 %v326
        %v704 = vpop.f32.mrb[0].mxu0
        %v705 = vadd.f32 0.0, %v704
        %v706 = vpop.f32.mrb[0].mxu0
        %707 = vmatprep.mubr.f32.mxu0 0.0
        %708 = vmatmul.mubr.f32.gmra.mrb[0].mxu0 %v329
        %v709 = vpop.f32.mrb[0].mxu0
        %v710 = vadd.f32 0.0, %v709
        %v711 = vpop.f32.mrb[0].mxu0
        %712 = vmatprep.mubr.f32.mxu0 0.0
        %713 = vmatmul.mubr.f32.gmra.mrb[0].mxu0 %v332
        %v714 = vpop.f32.mrb[0].mxu0
        %v715 = vadd.f32 0.0, %v714
        %v716 = vpop.f32.mrb[0].mxu0
        %717 = vdwg.mxu0
        %719 = vrot.lane.b32.xlu0 %v710, 127
        %v720 = vpop.permute.xlu0 %719
        %v722 = vadd.f32 %v705, %v720
        %724 = vrot.lane.b32.xlu0 %v715, 126
        %v725 = vpop.permute.xlu0 %724
        %v727 = vadd.f32 %v722, %v725
        %v728 = vadd.f32 %v727, %v427
        %v729 = vmax.f32 %v728, 0.0
        %731 = vrot.lane.b32.xlu0 %v729, 48
        %v732 = vpop.permute.xlu0 %731
        %vm734 = vcmask 523648
        %735 = vst.msk [vmem:[%s263] sm:$0xff] %vm734, %v732
        %v736 = vld [vmem:[#allocation2 + $0x20] sm:$0xff]
        %v737 = vld [vmem:[#allocation2 + $0x28] sm:$0xff]
        %v738 = vld [vmem:[#allocation2 + $0x30] sm:$0xff]
        %739 = vmatprep.subr.mxu0 0.0
        %740 = vmatpush1.msra.mxu0 %v736
        %741 = vmatprep.subr.mxu0 0.0
        %742 = vmatpush1.msra.mxu0 %v737
        %743 = vmatprep.subr.mxu0 0.0
        %744 = vmatpush1.msra.mxu0 %v738
        %745 = vmatprep.subr.mxu0 0.0
        %746 = vmatpush1.msra.mxu0 0.0
        %747 = vmatprep.subr.mxu0 0.0
        %748 = vmatpush1.msra.mxu0 0.0
        %749 = vmatprep.subr.mxu0 0.0
        %750 = vmatpush1.msra.mxu0 0.0
        %751 = vmatprep.subr.mxu0 0.0
        %752 = vmatpush1.msra.mxu0 0.0
        %753 = vmatprep.subr.mxu0 0.0
        %754 = vmatpush1.msra.mxu0 0.0
        %755 = vmatprep.subr.mxu0 0.0
        %756 = vmatpush1.msra.mxu0 0.0
        %757 = vmatprep.subr.mxu0 0.0
        %758 = vmatpush1.msra.mxu0 0.0
        %759 = vmatprep.subr.mxu0 0.0
        %760 = vmatpush1.msra.mxu0 0.0
        %761 = vmatprep.subr.mxu0 0.0
        %762 = vmatpush1.msra.mxu0 0.0
        %763 = vmatprep.subr.mxu0 0.0
        %764 = vmatpush1.msra.mxu0 0.0
        %765 = vmatprep.subr.mxu0 0.0
        %766 = vmatpush1.msra.mxu0 0.0
        %767 = vmatprep.subr.mxu0 0.0
        %768 = vmatpush1.msra.mxu0 0.0
        %769 = vmatprep.subr.mxu0 0.0
        %770 = vmatpush1.msra.mxu0 0.0
        %771 = vmatprep.subr.mxu0 0.0
        %772 = vmatpush1.msra.mxu0 0.0
        %773 = vmatprep.subr.mxu0 0.0
        %774 = vmatpush1.msra.mxu0 0.0
        %775 = vmatprep.subr.mxu0 0.0
        %776 = vmatpush1.msra.mxu0 0.0
        %777 = vmatprep.subr.mxu0 0.0
        %778 = vmatpush1.msra.mxu0 0.0
        %779 = vmatprep.subr.mxu0 0.0
        %780 = vmatpush1.msra.mxu0 0.0
        %781 = vmatprep.subr.mxu0 0.0
        %782 = vmatpush1.msra.mxu0 0.0
        %783 = vmatprep.subr.mxu0 0.0
        %784 = vmatpush1.msra.mxu0 0.0
        %785 = vmatprep.subr.mxu0 0.0
        %786 = vmatpush1.msra.mxu0 0.0
        %787 = vmatprep.subr.mxu0 0.0
        %788 = vmatpush1.msra.mxu0 0.0
        %789 = vmatprep.subr.mxu0 0.0
        %790 = vmatpush1.msra.mxu0 0.0
        %791 = vmatprep.subr.mxu0 0.0
        %792 = vmatpush1.msra.mxu0 0.0
        %793 = vmatprep.subr.mxu0 0.0
        %794 = vmatpush1.msra.mxu0 0.0
        %795 = vmatprep.subr.mxu0 0.0
        %796 = vmatpush1.msra.mxu0 0.0
        %797 = vmatprep.subr.mxu0 0.0
        %798 = vmatpush1.msra.mxu0 0.0
        %799 = vmatprep.subr.mxu0 0.0
        %800 = vmatpush1.msra.mxu0 0.0
        %801 = vmatprep.subr.mxu0 0.0
        %802 = vmatpush1.msra.mxu0 0.0
        %803 = vmatprep.mubr.f32.mxu0 0.0
        %804 = vmatmul.mubr.f32.gmra.mrb[0].mxu0 %v326
        %v805 = vpop.f32.mrb[0].mxu0
        %v806 = vadd.f32 0.0, %v805
        %v807 = vpop.f32.mrb[0].mxu0
        %808 = vmatprep.mubr.f32.mxu0 0.0
        %809 = vmatmul.mubr.f32.gmra.mrb[0].mxu0 %v329
        %v810 = vpop.f32.mrb[0].mxu0
        %v811 = vadd.f32 0.0, %v810
        %v812 = vpop.f32.mrb[0].mxu0
        %813 = vmatprep.mubr.f32.mxu0 0.0
        %814 = vmatmul.mubr.f32.gmra.mrb[0].mxu0 %v332
        %v815 = vpop.f32.mrb[0].mxu0
        %v816 = vadd.f32 0.0, %v815
        %v817 = vpop.f32.mrb[0].mxu0
        %818 = vdwg.mxu0
        %820 = vrot.lane.b32.xlu0 %v811, 127
        %v821 = vpop.permute.xlu0 %820
        %v823 = vadd.f32 %v806, %v821
        %825 = vrot.lane.b32.xlu0 %v816, 126
        %v826 = vpop.permute.xlu0 %825
        %v828 = vadd.f32 %v823, %v826
        %v829 = vadd.f32 %v828, %v427
        %v830 = vmax.f32 %v829, 0.0
        %832 = vrot.lane.b32.xlu0 %v830, 64
        %v833 = vpop.permute.xlu0 %832
        %vm835 = vcmask 654848
        %836 = vst.msk [vmem:[%s263] sm:$0xff] %vm835, %v833
        %v837 = vld [vmem:[#allocation2 + $0x28] sm:$0xff]
        %v838 = vld [vmem:[#allocation2 + $0x30] sm:$0xff]
        %v839 = vld [vmem:[#allocation2 + $0x38] sm:$0xff]
        %840 = vmatprep.subr.mxu0 0.0
        %841 = vmatpush1.msra.mxu0 %v837
        %842 = vmatprep.subr.mxu0 0.0
        %843 = vmatpush1.msra.mxu0 %v838
        %844 = vmatprep.subr.mxu0 0.0
        %845 = vmatpush1.msra.mxu0 %v839
        %846 = vmatprep.subr.mxu0 0.0
        %847 = vmatpush1.msra.mxu0 0.0
        %848 = vmatprep.subr.mxu0 0.0
        %849 = vmatpush1.msra.mxu0 0.0
        %850 = vmatprep.subr.mxu0 0.0
        %851 = vmatpush1.msra.mxu0 0.0
        %852 = vmatprep.subr.mxu0 0.0
        %853 = vmatpush1.msra.mxu0 0.0
        %854 = vmatprep.subr.mxu0 0.0
        %855 = vmatpush1.msra.mxu0 0.0
        %856 = vmatprep.subr.mxu0 0.0
        %857 = vmatpush1.msra.mxu0 0.0
        %858 = vmatprep.subr.mxu0 0.0
        %859 = vmatpush1.msra.mxu0 0.0
        %860 = vmatprep.subr.mxu0 0.0
        %861 = vmatpush1.msra.mxu0 0.0
        %862 = vmatprep.subr.mxu0 0.0
        %863 = vmatpush1.msra.mxu0 0.0
        %864 = vmatprep.subr.mxu0 0.0
        %865 = vmatpush1.msra.mxu0 0.0
        %866 = vmatprep.subr.mxu0 0.0
        %867 = vmatpush1.msra.mxu0 0.0
        %868 = vmatprep.subr.mxu0 0.0
        %869 = vmatpush1.msra.mxu0 0.0
        %870 = vmatprep.subr.mxu0 0.0
        %871 = vmatpush1.msra.mxu0 0.0
        %872 = vmatprep.subr.mxu0 0.0
        %873 = vmatpush1.msra.mxu0 0.0
        %874 = vmatprep.subr.mxu0 0.0
        %875 = vmatpush1.msra.mxu0 0.0
        %876 = vmatprep.subr.mxu0 0.0
        %877 = vmatpush1.msra.mxu0 0.0
        %878 = vmatprep.subr.mxu0 0.0
        %879 = vmatpush1.msra.mxu0 0.0
        %880 = vmatprep.subr.mxu0 0.0
        %881 = vmatpush1.msra.mxu0 0.0
        %882 = vmatprep.subr.mxu0 0.0
        %883 = vmatpush1.msra.mxu0 0.0
        %884 = vmatprep.subr.mxu0 0.0
        %885 = vmatpush1.msra.mxu0 0.0
        %886 = vmatprep.subr.mxu0 0.0
        %887 = vmatpush1.msra.mxu0 0.0
        %888 = vmatprep.subr.mxu0 0.0
        %889 = vmatpush1.msra.mxu0 0.0
        %890 = vmatprep.subr.mxu0 0.0
        %891 = vmatpush1.msra.mxu0 0.0
        %892 = vmatprep.subr.mxu0 0.0
        %893 = vmatpush1.msra.mxu0 0.0
        %894 = vmatprep.subr.mxu0 0.0
        %895 = vmatpush1.msra.mxu0 0.0
        %896 = vmatprep.subr.mxu0 0.0
        %897 = vmatpush1.msra.mxu0 0.0
        %898 = vmatprep.subr.mxu0 0.0
        %899 = vmatpush1.msra.mxu0 0.0
        %900 = vmatprep.subr.mxu0 0.0
        %901 = vmatpush1.msra.mxu0 0.0
        %902 = vmatprep.subr.mxu0 0.0
        %903 = vmatpush1.msra.mxu0 0.0
        %904 = vmatprep.mubr.f32.mxu0 0.0
        %905 = vmatmul.mubr.f32.gmra.mrb[0].mxu0 %v326
        %v906 = vpop.f32.mrb[0].mxu0
        %v907 = vadd.f32 0.0, %v906
        %v908 = vpop.f32.mrb[0].mxu0
        %909 = vmatprep.mubr.f32.mxu0 0.0
        %910 = vmatmul.mubr.f32.gmra.mrb[0].mxu0 %v329
        %v911 = vpop.f32.mrb[0].mxu0
        %v912 = vadd.f32 0.0, %v911
        %v913 = vpop.f32.mrb[0].mxu0
        %914 = vmatprep.mubr.f32.mxu0 0.0
        %915 = vmatmul.mubr.f32.gmra.mrb[0].mxu0 %v332
        %v916 = vpop.f32.mrb[0].mxu0
        %v917 = vadd.f32 0.0, %v916
        %v918 = vpop.f32.mrb[0].mxu0
        %919 = vdwg.mxu0
        %921 = vrot.lane.b32.xlu0 %v912, 127
        %v922 = vpop.permute.xlu0 %921
        %v924 = vadd.f32 %v907, %v922
        %926 = vrot.lane.b32.xlu0 %v917, 126
        %v927 = vpop.permute.xlu0 %926
        %v929 = vadd.f32 %v924, %v927
        %v930 = vadd.f32 %v929, %v427
        %v931 = vmax.f32 %v930, 0.0
        %933 = vrot.lane.b32.xlu0 %v931, 80
        %v934 = vpop.permute.xlu0 %933
        %vm936 = vcmask 786048
        %937 = vst.msk [vmem:[%s263] sm:$0xff] %vm936, %v934
        %v938 = vld [vmem:[#allocation2 + $0x30] sm:$0xff]
        %v939 = vld [vmem:[#allocation2 + $0x38] sm:$0xff]
        %v940 = vld [vmem:[#allocation2 + $0x40] sm:$0xff]
        %941 = vmatprep.subr.mxu0 0.0
        %942 = vmatpush1.msra.mxu0 %v938
        %943 = vmatprep.subr.mxu0 0.0
        %944 = vmatpush1.msra.mxu0 %v939
        %945 = vmatprep.subr.mxu0 0.0
        %946 = vmatpush1.msra.mxu0 %v940
        %947 = vmatprep.subr.mxu0 0.0
        %948 = vmatpush1.msra.mxu0 0.0
        %949 = vmatprep.subr.mxu0 0.0
        %950 = vmatpush1.msra.mxu0 0.0
        %951 = vmatprep.subr.mxu0 0.0
        %952 = vmatpush1.msra.mxu0 0.0
        %953 = vmatprep.subr.mxu0 0.0
        %954 = vmatpush1.msra.mxu0 0.0
        %955 = vmatprep.subr.mxu0 0.0
        %956 = vmatpush1.msra.mxu0 0.0
        %957 = vmatprep.subr.mxu0 0.0
        %958 = vmatpush1.msra.mxu0 0.0
        %959 = vmatprep.subr.mxu0 0.0
        %960 = vmatpush1.msra.mxu0 0.0
        %961 = vmatprep.subr.mxu0 0.0
        %962 = vmatpush1.msra.mxu0 0.0
        %963 = vmatprep.subr.mxu0 0.0
        %964 = vmatpush1.msra.mxu0 0.0
        %965 = vmatprep.subr.mxu0 0.0
        %966 = vmatpush1.msra.mxu0 0.0
        %967 = vmatprep.subr.mxu0 0.0
        %968 = vmatpush1.msra.mxu0 0.0
        %969 = vmatprep.subr.mxu0 0.0
        %970 = vmatpush1.msra.mxu0 0.0
        %971 = vmatprep.subr.mxu0 0.0
        %972 = vmatpush1.msra.mxu0 0.0
        %973 = vmatprep.subr.mxu0 0.0
        %974 = vmatpush1.msra.mxu0 0.0
        %975 = vmatprep.subr.mxu0 0.0
        %976 = vmatpush1.msra.mxu0 0.0
        %977 = vmatprep.subr.mxu0 0.0
        %978 = vmatpush1.msra.mxu0 0.0
        %979 = vmatprep.subr.mxu0 0.0
        %980 = vmatpush1.msra.mxu0 0.0
        %981 = vmatprep.subr.mxu0 0.0
        %982 = vmatpush1.msra.mxu0 0.0
        %983 = vmatprep.subr.mxu0 0.0
        %984 = vmatpush1.msra.mxu0 0.0
        %985 = vmatprep.subr.mxu0 0.0
        %986 = vmatpush1.msra.mxu0 0.0
        %987 = vmatprep.subr.mxu0 0.0
        %988 = vmatpush1.msra.mxu0 0.0
        %989 = vmatprep.subr.mxu0 0.0
        %990 = vmatpush1.msra.mxu0 0.0
        %991 = vmatprep.subr.mxu0 0.0
        %992 = vmatpush1.msra.mxu0 0.0
        %993 = vmatprep.subr.mxu0 0.0
        %994 = vmatpush1.msra.mxu0 0.0
        %995 = vmatprep.subr.mxu0 0.0
        %996 = vmatpush1.msra.mxu0 0.0
        %997 = vmatprep.subr.mxu0 0.0
        %998 = vmatpush1.msra.mxu0 0.0
        %999 = vmatprep.subr.mxu0 0.0
        %1000 = vmatpush1.msra.mxu0 0.0
        %1001 = vmatprep.subr.mxu0 0.0
        %1002 = vmatpush1.msra.mxu0 0.0
        %1003 = vmatprep.subr.mxu0 0.0
        %1004 = vmatpush1.msra.mxu0 0.0
        %1005 = vmatprep.mubr.f32.mxu0 0.0
        %1006 = vmatmul.mubr.f32.gmra.mrb[0].mxu0 %v326
        %v1007 = vpop.f32.mrb[0].mxu0
        %v1008 = vadd.f32 0.0, %v1007
        %v1009 = vpop.f32.mrb[0].mxu0
        %1010 = vmatprep.mubr.f32.mxu0 0.0
        %1011 = vmatmul.mubr.f32.gmra.mrb[0].mxu0 %v329
        %v1012 = vpop.f32.mrb[0].mxu0
        %v1013 = vadd.f32 0.0, %v1012
        %v1014 = vpop.f32.mrb[0].mxu0
        %1015 = vmatprep.mubr.f32.mxu0 0.0
        %1016 = vmatmul.mubr.f32.gmra.mrb[0].mxu0 %v332
        %v1017 = vpop.f32.mrb[0].mxu0
        %v1018 = vadd.f32 0.0, %v1017
        %v1019 = vpop.f32.mrb[0].mxu0
        %1020 = vdwg.mxu0
        %1022 = vrot.lane.b32.xlu0 %v1013, 127
        %v1023 = vpop.permute.xlu0 %1022
        %v1025 = vadd.f32 %v1008, %v1023
        %1027 = vrot.lane.b32.xlu0 %v1018, 126
        %v1028 = vpop.permute.xlu0 %1027
        %v1030 = vadd.f32 %v1025, %v1028
        %v1031 = vadd.f32 %v1030, %v427
        %v1032 = vmax.f32 %v1031, 0.0
        %1034 = vrot.lane.b32.xlu0 %v1032, 96
        %v1035 = vpop.permute.xlu0 %1034
        %vm1037 = vcmask 917248
        %1038 = vst.msk [vmem:[%s263] sm:$0xff] %vm1037, %v1035
        %v1039 = vld [vmem:[#allocation2 + $0x38] sm:$0xff]
        %v1040 = vld [vmem:[#allocation2 + $0x40] sm:$0xff]
        %v1041 = vld [vmem:[#allocation2 + $0x48] sm:$0xff]
        %1042 = vmatprep.subr.mxu0 0.0
        %1043 = vmatpush1.msra.mxu0 %v1039
        %1044 = vmatprep.subr.mxu0 0.0
        %1045 = vmatpush1.msra.mxu0 %v1040
        %1046 = vmatprep.subr.mxu0 0.0
        %1047 = vmatpush1.msra.mxu0 %v1041
        %1048 = vmatprep.subr.mxu0 0.0
        %1049 = vmatpush1.msra.mxu0 0.0
        %1050 = vmatprep.subr.mxu0 0.0
        %1051 = vmatpush1.msra.mxu0 0.0
        %1052 = vmatprep.subr.mxu0 0.0
        %1053 = vmatpush1.msra.mxu0 0.0
        %1054 = vmatprep.subr.mxu0 0.0
        %1055 = vmatpush1.msra.mxu0 0.0
        %1056 = vmatprep.subr.mxu0 0.0
        %1057 = vmatpush1.msra.mxu0 0.0
        %1058 = vmatprep.subr.mxu0 0.0
        %1059 = vmatpush1.msra.mxu0 0.0
        %1060 = vmatprep.subr.mxu0 0.0
        %1061 = vmatpush1.msra.mxu0 0.0
        %1062 = vmatprep.subr.mxu0 0.0
        %1063 = vmatpush1.msra.mxu0 0.0
        %1064 = vmatprep.subr.mxu0 0.0
        %1065 = vmatpush1.msra.mxu0 0.0
        %1066 = vmatprep.subr.mxu0 0.0
        %1067 = vmatpush1.msra.mxu0 0.0
        %1068 = vmatprep.subr.mxu0 0.0
        %1069 = vmatpush1.msra.mxu0 0.0
        %1070 = vmatprep.subr.mxu0 0.0
        %1071 = vmatpush1.msra.mxu0 0.0
        %1072 = vmatprep.subr.mxu0 0.0
        %1073 = vmatpush1.msra.mxu0 0.0
        %1074 = vmatprep.subr.mxu0 0.0
        %1075 = vmatpush1.msra.mxu0 0.0
        %1076 = vmatprep.subr.mxu0 0.0
        %1077 = vmatpush1.msra.mxu0 0.0
        %1078 = vmatprep.subr.mxu0 0.0
        %1079 = vmatpush1.msra.mxu0 0.0
        %1080 = vmatprep.subr.mxu0 0.0
        %1081 = vmatpush1.msra.mxu0 0.0
        %1082 = vmatprep.subr.mxu0 0.0
        %1083 = vmatpush1.msra.mxu0 0.0
        %1084 = vmatprep.subr.mxu0 0.0
        %1085 = vmatpush1.msra.mxu0 0.0
        %1086 = vmatprep.subr.mxu0 0.0
        %1087 = vmatpush1.msra.mxu0 0.0
        %1088 = vmatprep.subr.mxu0 0.0
        %1089 = vmatpush1.msra.mxu0 0.0
        %1090 = vmatprep.subr.mxu0 0.0
        %1091 = vmatpush1.msra.mxu0 0.0
        %1092 = vmatprep.subr.mxu0 0.0
        %1093 = vmatpush1.msra.mxu0 0.0
        %1094 = vmatprep.subr.mxu0 0.0
        %1095 = vmatpush1.msra.mxu0 0.0
        %1096 = vmatprep.subr.mxu0 0.0
        %1097 = vmatpush1.msra.mxu0 0.0
        %1098 = vmatprep.subr.mxu0 0.0
        %1099 = vmatpush1.msra.mxu0 0.0
        %1100 = vmatprep.subr.mxu0 0.0
        %1101 = vmatpush1.msra.mxu0 0.0
        %1102 = vmatprep.subr.mxu0 0.0
        %1103 = vmatpush1.msra.mxu0 0.0
        %1104 = vmatprep.subr.mxu0 0.0
        %1105 = vmatpush1.msra.mxu0 0.0
        %1106 = vmatprep.mubr.f32.mxu0 0.0
        %1107 = vmatmul.mubr.f32.gmra.mrb[0].mxu0 %v326
        %v1108 = vpop.f32.mrb[0].mxu0
        %v1109 = vadd.f32 0.0, %v1108
        %v1110 = vpop.f32.mrb[0].mxu0
        %1111 = vmatprep.mubr.f32.mxu0 0.0
        %1112 = vmatmul.mubr.f32.gmra.mrb[0].mxu0 %v329
        %v1113 = vpop.f32.mrb[0].mxu0
        %v1114 = vadd.f32 0.0, %v1113
        %v1115 = vpop.f32.mrb[0].mxu0
        %1116 = vmatprep.mubr.f32.mxu0 0.0
        %1117 = vmatmul.mubr.f32.gmra.mrb[0].mxu0 %v332
        %v1118 = vpop.f32.mrb[0].mxu0
        %v1119 = vadd.f32 0.0, %v1118
        %v1120 = vpop.f32.mrb[0].mxu0
        %1121 = vdwg.mxu0
        %1123 = vrot.lane.b32.xlu0 %v1114, 127
        %v1124 = vpop.permute.xlu0 %1123
        %v1126 = vadd.f32 %v1109, %v1124
        %1128 = vrot.lane.b32.xlu0 %v1119, 126
        %v1129 = vpop.permute.xlu0 %1128
        %v1131 = vadd.f32 %v1126, %v1129
        %v1132 = vadd.f32 %v1131, %v427
        %v1133 = vmax.f32 %v1132, 0.0
        %1135 = vrot.lane.b32.xlu0 %v1133, 112
        %v1136 = vpop.permute.xlu0 %1135
        %vm1138 = vcmask 1048448
        %1139 = vst.msk [vmem:[%s263] sm:$0xff] %vm1138, %v1136
        %s1140 = sand.u32 %s142, 1
        %s1141 = scalar_lea.sflag [#allocation4], %s1140
        %s1142 = sand.u32 %s142, 1
        %s1143 = smul.addr %s1142, 8
        %s1144 = scalar_lea.vmem [#allocation3], %s1143
        // Predicated region
        $region37: #{tpu_custom_call.1} parent=35 // pred_check
          %p1145 = pneg %p152
        $region38: #{tpu_custom_call.1} parent=35 // pred_check_branch
          %1147 = sbr.rel (%p1145) target = $region40
        $region39: #{tpu_custom_call.1} parent=35 // pred_region
          %s1149 = ssub.s32 128, 128
          %1150 = vsyncadd %s1141, %s1149
          %s1151 = smul.addr %s22, 2
          %s1152 = sadd.s32 %s23, %s1151
          %s1153 = smul.addr %s1152, 128
          %s1154 = scalar_lea.hbm %s4, %s1153
          %s1156 = sshll.u32 %s1144, 4
          %s1157 = int_to_ptr.vmem [resolvable:$true] %s1156
          %1159 = dma.vmem_to_hbm [thread:$0]  %s1157, 128, %s1154, %s1141
        $region40: #{tpu_custom_call.1} parent=35 // pred_fallthru
          _
      $region36: #{tpu_custom_call.1} parent=5 // pred_fallthru
        _
      %p1160 = scmp.le.s32.totalorder 2, %s13
      // Predicated region
      $region41: #{tpu_custom_call.1} parent=5 // pred_check
        %p1161 = pneg %p1160
      $region42: #{tpu_custom_call.1} parent=5 // pred_check_branch
        %1163 = sbr.rel (%p1161) target = $region44
      $region43: #{tpu_custom_call.1} parent=5 // pred_region
        %s1164 = ssub.s32 %s13, 2
        // Predicated region
        $region45: #{tpu_custom_call.1} parent=43 // pred_check
          %p1165 = pneg %p158
        $region46: #{tpu_custom_call.1} parent=43 // pred_check_branch
          %1167 = sbr.rel (%p1165) target = $region48
        $region47: #{tpu_custom_call.1} parent=43 // pred_region
          %s1168 = sand.u32 %s143, 1
          %s1169 = scalar_lea.sflag [#allocation4], %s1168
          %s1170 = sand.u32 %s143, 1
          %s1171 = smul.addr %s1170, 8
          %s1172 = scalar_lea.vmem [#allocation3], %s1171
          %1173 = dma.done %s1169, 128
        $region48: #{tpu_custom_call.1} parent=43 // pred_fallthru
          _
      $region44: #{tpu_custom_call.1} parent=5 // pred_fallthru
        _
    $region6: #{tpu_custom_call.1} parent=1 // loop_footer
      %s17 = sadd.s32 1, %s13
    $region7: #{tpu_custom_call.1} parent=1 // loop_footer_branch
      %12 = sbr.rel target = $region3
    $region8: #{tpu_custom_call.1} parent=1 // loop_exit
      _
    %1174 = vsyncpa [#allocation4], 1
    %s1175 = scalar_lea.sflag [#allocation4], 1
    %1176 = vsyncpa %s1175, 1

</llo_original>
